<compile_context>
chip_gen: v5e
topology: v5e:2x2
jax: 0.10.0
libtpu: 0.0.40
codegen_flags: <defaults>
</compile_context>

<pallas_src>
import numpy as np
import jax
import jax.numpy as jnp
from jax.experimental import pallas as pl
from jax.experimental.pallas import tpu as pltpu

# Match PyTorch float32 matmul semantics (and keep the +/-1 selection matmul
# used for the pair gather effectively exact) on both kernel and reference.
jax.config.update("jax_default_matmul_precision", "highest")

_LANE = 128


def _round_up(x, m):
    return int(pl.cdiv(x, m) * m)


# ---------------------------------------------------------------------------
# Fused kernel: node MLP + triu pair squared distances + (sc - threshold)
# One grid step == one flattened batch element (B1*B2 axis, "parallel").
# ---------------------------------------------------------------------------
def _make_fused_kernel(n_layers):
    def kernel(thr_ref, nf_ref, sc_ref, mt_ref, *rest):
        wb_refs = rest[:2 * n_layers]
        sc_out_ref, dist_ref = rest[2 * n_layers], rest[2 * n_layers + 1]

        # sc - sc_threshold (P_pad on lanes -> lane-dense, unmasked store).
        thr = thr_ref[0, 0]
        sc_out_ref[...] = (sc_ref[...] - thr).astype(sc_out_ref.dtype)

        # Node MLP in transposed form: h is (width, N), node axis on lanes.
        h = nf_ref[0]                                    # (F, N)
        for i in range(n_layers):
            w = wb_refs[2 * i][...]                      # (out_width, in_width)
            b = wb_refs[2 * i + 1][...]                  # (out_width, 1)
            h = jnp.dot(w, h, preferred_element_type=jnp.float32) + b
            if i < n_layers - 1:
                h = jnp.maximum(h, 0.0)
        # h is now coords^T: (E, N) -- kept in VMEM, never written to HBM.

        # Pairwise differences via the static +/-1 selection matrix (MXU):
        #   diff^T[e, p] = coords[rows[p], e] - coords[cols[p], e]
        diff_t = jnp.dot(h, mt_ref[...],
                         preferred_element_type=jnp.float32)     # (E, P_pad)
        d = jnp.sum(diff_t * diff_t, axis=0, keepdims=True)      # (1, P_pad)
        dist_ref[0] = d.astype(dist_ref.dtype)

    return kernel


# ---------------------------------------------------------------------------
# Module-equivalent wrapper
# ---------------------------------------------------------------------------
def structural_feature_space_forward(sc, node_features, params):
    """sc: (B1, B2, P); node_features: (B1, B2, N, F).

    Returns (sc - sc_threshold, node_sq_dists), both shaped (B1, B2, P).
    """
    B1, B2, N, F = node_features.shape
    B = B1 * B2
    P = sc.shape[-1]
    weights, biases = params["weights"], params["biases"]
    n_layers = len(weights)
    E = weights[-1].shape[1]
    P_pad = _round_up(P, _LANE)

    mt = params["pair_diff_t"]                           # (N, P_pad), static
    assert mt.shape == (N, P_pad)

    # --- plain-JAX layout glue (cheap, fuses under jit) ----------------------
    nf_t = node_features.reshape(B, N, F).transpose(0, 2, 1)            # (B, F, N)
    sc_p = jnp.pad(sc.reshape(B, P), ((0, 0), (0, P_pad - P)))[:, None, :]  # (B,1,P_pad)
    thr = params["sc_threshold"].reshape(1, 1)

    wb_flat, wb_specs = [], []
    for w, b in zip(weights, biases):
        wt = w.T                            # (out_width, in_width)
        bt = b.reshape(-1, 1)               # (out_width, 1)
        wb_flat += [wt, bt]
        wb_specs += [pl.BlockSpec(wt.shape, lambda i: (0, 0)),
                     pl.BlockSpec(bt.shape, lambda i: (0, 0))]

    mlp_flops = 2 * N * sum(w.shape[0] * w.shape[1] for w in weights)
    pair_flops = 2 * E * N * P_pad + 3 * E * P_pad
    cost = pl.CostEstimate(
        flops=int(B * (mlp_flops + pair_flops + P_pad)),
        transcendentals=0,
        bytes_accessed=int(4 * (nf_t.size + sc_p.size + mt.size + thr.size
                                + sum(x.size for x in wb_flat)
                                + 2 * B * P_pad)),
    )

    kernel = _make_fused_kernel(n_layers)
    sc_out, dists = pl.pallas_call(
        kernel,
        out_shape=(jax.ShapeDtypeStruct((B, 1, P_pad), sc.dtype),
                   jax.ShapeDtypeStruct((B, 1, P_pad), node_features.dtype)),
        grid=(B,),
        in_specs=[
            pl.BlockSpec((1, 1), lambda i: (0, 0),
                         memory_space=pltpu.MemorySpace.SMEM),   # sc_threshold
            pl.BlockSpec((1, F, N), lambda i: (i, 0, 0)),        # node feats^T
            pl.BlockSpec((1, 1, P_pad), lambda i: (i, 0, 0)),    # sc (lane-padded)
            pl.BlockSpec((N, P_pad), lambda i: (0, 0)),          # pair matrix M^T
            *wb_specs,                                           # MLP weights/biases
        ],
        out_specs=(
            pl.BlockSpec((1, 1, P_pad), lambda i: (i, 0, 0)),
            pl.BlockSpec((1, 1, P_pad), lambda i: (i, 0, 0)),
        ),
        compiler_params=pltpu.CompilerParams(
            dimension_semantics=("parallel",),       # shard batch across TCs (v7x)
            vmem_limit_bytes=32 * 1024 * 1024,       # within v5e/v6e/v7x scoped VMEM
        ),
        cost_estimate=cost,
    )(thr, nf_t, sc_p, mt, *wb_flat)

    sc_out = sc_out[:, 0, :P].reshape(B1, B2, P)
    dists = dists[:, 0, :P].reshape(B1, B2, P)
    return sc_out, dists


# ---------------------------------------------------------------------------
# Parameter init (matches the PyTorch module's structure)
# ---------------------------------------------------------------------------
def init_params(key, num_nodes, num_node_features, num_embedding_dims,
                hidden_layer_width, num_hidden_layers, dtype=jnp.float32):
    dims = ([num_node_features]
            + [hidden_layer_width] * num_hidden_layers
            + [num_embedding_dims])
    weights, biases = [], []
    for i in range(len(dims) - 1):
        key, wk = jax.random.split(key)
        w = (jax.random.normal(wk, (dims[i], dims[i + 1]), dtype=dtype)
             / np.sqrt(dims[i]).astype(np.float32))
        b = jnp.zeros((dims[i + 1],), dtype=dtype)
        weights.append(w)
        biases.append(b)

    # isingmodel.get_triu_indices_for_products -> strict upper triangle (i < j)
    rows_np, cols_np = np.triu_indices(num_nodes, k=1)
    P = rows_np.size
    P_pad = _round_up(P, _LANE)
    # Static +/-1 difference-selection matrix, zero-padded to lane-dense P_pad.
    m = np.zeros((P_pad, num_nodes), dtype=np.float32)
    m[np.arange(P), rows_np] = 1.0
    m[np.arange(P), cols_np] = -1.0
    return {
        "sc_threshold": jnp.zeros((1,), dtype=dtype),   # matches nn.Parameter init
        "weights": weights,
        "biases": biases,
        "triu_rows": jnp.asarray(rows_np, dtype=jnp.int32),
        "triu_cols": jnp.asarray(cols_np, dtype=jnp.int32),
        "pair_diff_t": jnp.asarray(m.T),                # (N, P_pad)
    }


# ---------------------------------------------------------------------------
# Pure-JAX reference (mirrors the PyTorch forward)
# ---------------------------------------------------------------------------
def reference_forward(sc, node_features, params):
    h = node_features
    ws, bs = params["weights"], params["biases"]
    for i, (w, b) in enumerate(zip(ws, bs)):
        h = h @ w + b
        if i < len(ws) - 1:
            h = jnp.maximum(h, 0.0)
    rows, cols = params["triu_rows"], params["triu_cols"]
    diff = h[:, :, rows, :] - h[:, :, cols, :]
    return sc - params["sc_threshold"][0], jnp.sum(diff * diff, axis=-1)


if __name__ == "__main__":
    # Small, deterministic example shapes.
    num_nodes = 16
    num_node_features = 4
    num_embedding_dims = 4
    hidden_layer_width = 32
    num_hidden_layers = 2
    B1, B2 = 2, 2                                    # (models_per_subject, num_subjects)
    num_pairs = num_nodes * (num_nodes - 1) // 2     # 120

    key = jax.random.PRNGKey(0)
    key, kp, kf, ks = jax.random.split(key, 4)
    params = init_params(kp, num_nodes, num_node_features, num_embedding_dims,
                         hidden_layer_width, num_hidden_layers)

    node_features = jax.random.normal(
        kf, (B1, B2, num_nodes, num_node_features), dtype=jnp.float32)
    sc = jax.random.normal(ks, (B1, B2, num_pairs), dtype=jnp.float32)

    fwd = jax.jit(structural_feature_space_forward)
    sc_out, sq_dists = fwd(sc, node_features, params)
    sc_out = jax.block_until_ready(sc_out)
    sq_dists = jax.block_until_ready(sq_dists)

    sc_ref, sq_ref = reference_forward(sc, node_features, params)
    assert sc_out.shape == (B1, B2, num_pairs)
    assert sq_dists.shape == (B1, B2, num_pairs)
    np.testing.assert_allclose(np.asarray(sc_out), np.asarray(sc_ref),
                               rtol=1e-5, atol=1e-5)
    np.testing.assert_allclose(np.asarray(sq_dists), np.asarray(sq_ref),
                               rtol=1e-4, atol=1e-4)
    print("KERNEL_OK")
</pallas_src>

<mosaic_0001>
module attributes {stable_mosaic.version = 11 : i64} {
  func.func @kernel(%arg0: i32, %arg1: memref<1x1xf32, #tpu.memory_space<smem>>, %arg2: memref<1x4x16xf32, #tpu.memory_space<vmem>>, %arg3: memref<1x1x128xf32, #tpu.memory_space<vmem>>, %arg4: memref<16x128xf32, #tpu.memory_space<vmem>>, %arg5: memref<32x4xf32, #tpu.memory_space<vmem>>, %arg6: memref<32x1xf32, #tpu.memory_space<vmem>>, %arg7: memref<32x32xf32, #tpu.memory_space<vmem>>, %arg8: memref<32x1xf32, #tpu.memory_space<vmem>>, %arg9: memref<4x32xf32, #tpu.memory_space<vmem>>, %arg10: memref<4x1xf32, #tpu.memory_space<vmem>>, %arg11: memref<1x1x128xf32, #tpu.memory_space<vmem>>, %arg12: memref<1x1x128xf32, #tpu.memory_space<vmem>>) attributes {dimension_semantics = [#tpu.dimension_semantics<parallel>], iteration_bounds = array<i64: 4>, scalar_prefetch = 0 : i64, scratch_operands = 0 : i64, tpu.core_type = #tpu.core_type<tc>, window_params = [{transform_indices = @transform_0, window_bounds = array<i64: 1, 1>}, {transform_indices = @transform_1, window_bounds = array<i64: 1, 4, 16>}, {transform_indices = @transform_2, window_bounds = array<i64: 1, 1, 128>}, {pipeline_mode = #tpu.pipeline_mode<synchronous>, transform_indices = @transform_3, window_bounds = array<i64: 16, 128>}, {pipeline_mode = #tpu.pipeline_mode<synchronous>, transform_indices = @transform_4, window_bounds = array<i64: 32, 4>}, {pipeline_mode = #tpu.pipeline_mode<synchronous>, transform_indices = @transform_5, window_bounds = array<i64: 32, 1>}, {pipeline_mode = #tpu.pipeline_mode<synchronous>, transform_indices = @transform_6, window_bounds = array<i64: 32, 32>}, {pipeline_mode = #tpu.pipeline_mode<synchronous>, transform_indices = @transform_7, window_bounds = array<i64: 32, 1>}, {pipeline_mode = #tpu.pipeline_mode<synchronous>, transform_indices = @transform_8, window_bounds = array<i64: 4, 32>}, {pipeline_mode = #tpu.pipeline_mode<synchronous>, transform_indices = @transform_9, window_bounds = array<i64: 4, 1>}, {transform_indices = @transform_10, window_bounds = array<i64: 1, 1, 128>}, {transform_indices = @transform_11, window_bounds = array<i64: 1, 1, 128>}]} {
    %c0 = arith.constant 0 : index
    %c0_0 = arith.constant 0 : index
    %0 = memref.load %arg1[%c0, %c0_0] : memref<1x1xf32, #tpu.memory_space<smem>>
    %c0_1 = arith.constant 0 : index
    %c0_2 = arith.constant 0 : index
    %c0_3 = arith.constant 0 : index
    %1 = vector.load %arg3[%c0_1, %c0_2, %c0_3] : memref<1x1x128xf32, #tpu.memory_space<vmem>>, vector<1x1x128xf32>
    %2 = vector.broadcast %0 : f32 to vector<1x1x128xf32>
    %3 = arith.subf %1, %2 : vector<1x1x128xf32>
    %c0_4 = arith.constant 0 : index
    %c0_5 = arith.constant 0 : index
    %c0_6 = arith.constant 0 : index
    %4 = vector.load %arg11[%c0_4, %c0_5, %c0_6] : memref<1x1x128xf32, #tpu.memory_space<vmem>>, vector<1x1x128xf32>
    tpu.vector_store %arg11[%c0_4, %c0_5, %c0_6], %3 {strides = array<i32>} : memref<1x1x128xf32, #tpu.memory_space<vmem>>, vector<1x1x128xf32>,
    %c0_7 = arith.constant 0 : index
    %c0_8 = arith.constant 0 : index
    %c0_9 = arith.constant 0 : index
    %5 = vector.load %arg2[%c0_7, %c0_8, %c0_9] : memref<1x4x16xf32, #tpu.memory_space<vmem>>, vector<1x4x16xf32>
    %6 = vector.shape_cast %5 : vector<1x4x16xf32> to vector<4x16xf32>
    %c0_10 = arith.constant 0 : index
    %c0_11 = arith.constant 0 : index
    %7 = vector.load %arg5[%c0_10, %c0_11] : memref<32x4xf32, #tpu.memory_space<vmem>>, vector<32x4xf32>
    %c0_12 = arith.constant 0 : index
    %c0_13 = arith.constant 0 : index
    %8 = vector.load %arg6[%c0_12, %c0_13] : memref<32x1xf32, #tpu.memory_space<vmem>>, vector<32x1xf32>
    %cst = arith.constant dense<0.000000e+00> : vector<32x16xf32>
    %9 = tpu.matmul %7, %6, %cst {dimension_numbers = #tpu.dot_dimension_numbers<[1], [0], [0], [1], [0, 0, 1, 1], [], []>, precision = #tpu.contract_precision<fp32>} : vector<32x4xf32>, vector<4x16xf32>, vector<32x16xf32> -> vector<32x16xf32>
    %10 = vector.broadcast %8 : vector<32x1xf32> to vector<32x16xf32>
    %11 = arith.addf %9, %10 : vector<32x16xf32>
    %cst_14 = arith.constant 0.000000e+00 : f32
    %12 = vector.broadcast %cst_14 : f32 to vector<32x16xf32>
    %13 = arith.maximumf %11, %12 : vector<32x16xf32>
    %c0_15 = arith.constant 0 : index
    %c0_16 = arith.constant 0 : index
    %14 = vector.load %arg7[%c0_15, %c0_16] : memref<32x32xf32, #tpu.memory_space<vmem>>, vector<32x32xf32>
    %c0_17 = arith.constant 0 : index
    %c0_18 = arith.constant 0 : index
    %15 = vector.load %arg8[%c0_17, %c0_18] : memref<32x1xf32, #tpu.memory_space<vmem>>, vector<32x1xf32>
    %cst_19 = arith.constant dense<0.000000e+00> : vector<32x16xf32>
    %16 = tpu.matmul %14, %13, %cst_19 {dimension_numbers = #tpu.dot_dimension_numbers<[1], [0], [0], [1], [0, 0, 1, 1], [], []>, precision = #tpu.contract_precision<fp32>} : vector<32x32xf32>, vector<32x16xf32>, vector<32x16xf32> -> vector<32x16xf32>
    %17 = vector.broadcast %15 : vector<32x1xf32> to vector<32x16xf32>
    %18 = arith.addf %16, %17 : vector<32x16xf32>
    %cst_20 = arith.constant 0.000000e+00 : f32
    %19 = vector.broadcast %cst_20 : f32 to vector<32x16xf32>
    %20 = arith.maximumf %18, %19 : vector<32x16xf32>
    %c0_21 = arith.constant 0 : index
    %c0_22 = arith.constant 0 : index
    %21 = vector.load %arg9[%c0_21, %c0_22] : memref<4x32xf32, #tpu.memory_space<vmem>>, vector<4x32xf32>
    %c0_23 = arith.constant 0 : index
    %c0_24 = arith.constant 0 : index
    %22 = vector.load %arg10[%c0_23, %c0_24] : memref<4x1xf32, #tpu.memory_space<vmem>>, vector<4x1xf32>
    %cst_25 = arith.constant dense<0.000000e+00> : vector<4x16xf32>
    %23 = tpu.matmul %21, %20, %cst_25 {dimension_numbers = #tpu.dot_dimension_numbers<[1], [0], [0], [1], [0, 0, 1, 1], [], []>, precision = #tpu.contract_precision<fp32>} : vector<4x32xf32>, vector<32x16xf32>, vector<4x16xf32> -> vector<4x16xf32>
    %24 = vector.broadcast %22 : vector<4x1xf32> to vector<4x16xf32>
    %25 = arith.addf %23, %24 : vector<4x16xf32>
    %c0_26 = arith.constant 0 : index
    %c0_27 = arith.constant 0 : index
    %26 = vector.load %arg4[%c0_26, %c0_27] : memref<16x128xf32, #tpu.memory_space<vmem>>, vector<16x128xf32>
    %cst_28 = arith.constant dense<0.000000e+00> : vector<4x128xf32>
    %27 = tpu.matmul %25, %26, %cst_28 {dimension_numbers = #tpu.dot_dimension_numbers<[1], [0], [0], [1], [0, 0, 1, 1], [], []>, precision = #tpu.contract_precision<fp32>} : vector<4x16xf32>, vector<16x128xf32>, vector<4x128xf32> -> vector<4x128xf32>
    %28 = arith.mulf %27, %27 : vector<4x128xf32>
    %cst_29 = arith.constant dense<0.000000e+00> : vector<128xf32>
    %29 = vector.multi_reduction <add>, %28, %cst_29 [0] : vector<4x128xf32> to vector<128xf32>
    %30 = vector.shape_cast %29 : vector<128xf32> to vector<1x128xf32>
    %c0_30 = arith.constant 0 : index
    %c0_31 = arith.constant 0 : index
    %c0_32 = arith.constant 0 : index
    %31 = vector.load %arg12[%c0_30, %c0_31, %c0_32] : memref<1x1x128xf32, #tpu.memory_space<vmem>>, vector<1x1x128xf32>
    %32 = vector.shape_cast %31 : vector<1x1x128xf32> to vector<1x128xf32>
    %33 = vector.shape_cast %30 : vector<1x128xf32> to vector<1x1x128xf32>
    tpu.vector_store %arg12[%c0_30, %c0_31, %c0_32], %33 {strides = array<i32>} : memref<1x1x128xf32, #tpu.memory_space<vmem>>, vector<1x1x128xf32>,
    return
  }
  func.func @transform_0(%arg0: i32) -> (i32, i32) {
    %c0_i32 = arith.constant 0 : i32
    %c0_i32_0 = arith.constant 0 : i32
    %c0_i32_1 = arith.constant 0 : i32
    return %c0_i32, %c0_i32_0 : i32, i32
  }
  func.func @transform_1(%arg0: i32) -> (i32, i32, i32) {
    %c0_i32 = arith.constant 0 : i32
    %c0_i32_0 = arith.constant 0 : i32
    %c0_i32_1 = arith.constant 0 : i32
    return %arg0, %c0_i32, %c0_i32_0 : i32, i32, i32
  }
  func.func @transform_2(%arg0: i32) -> (i32, i32, i32) {
    %c0_i32 = arith.constant 0 : i32
    %c0_i32_0 = arith.constant 0 : i32
    %c0_i32_1 = arith.constant 0 : i32
    return %arg0, %c0_i32, %c0_i32_0 : i32, i32, i32
  }
  func.func @transform_3(%arg0: i32) -> (i32, i32) {
    %c0_i32 = arith.constant 0 : i32
    %c0_i32_0 = arith.constant 0 : i32
    %c0_i32_1 = arith.constant 0 : i32
    return %c0_i32, %c0_i32_0 : i32, i32
  }
  func.func @transform_4(%arg0: i32) -> (i32, i32) {
    %c0_i32 = arith.constant 0 : i32
    %c0_i32_0 = arith.constant 0 : i32
    %c0_i32_1 = arith.constant 0 : i32
    return %c0_i32, %c0_i32_0 : i32, i32
  }
  func.func @transform_5(%arg0: i32) -> (i32, i32) {
    %c0_i32 = arith.constant 0 : i32
    %c0_i32_0 = arith.constant 0 : i32
    %c0_i32_1 = arith.constant 0 : i32
    return %c0_i32, %c0_i32_0 : i32, i32
  }
  func.func @transform_6(%arg0: i32) -> (i32, i32) {
    %c0_i32 = arith.constant 0 : i32
    %c0_i32_0 = arith.constant 0 : i32
    %c0_i32_1 = arith.constant 0 : i32
    return %c0_i32, %c0_i32_0 : i32, i32
  }
  func.func @transform_7(%arg0: i32) -> (i32, i32) {
    %c0_i32 = arith.constant 0 : i32
    %c0_i32_0 = arith.constant 0 : i32
    %c0_i32_1 = arith.constant 0 : i32
    return %c0_i32, %c0_i32_0 : i32, i32
  }
  func.func @transform_8(%arg0: i32) -> (i32, i32) {
    %c0_i32 = arith.constant 0 : i32
    %c0_i32_0 = arith.constant 0 : i32
    %c0_i32_1 = arith.constant 0 : i32
    return %c0_i32, %c0_i32_0 : i32, i32
  }
  func.func @transform_9(%arg0: i32) -> (i32, i32) {
    %c0_i32 = arith.constant 0 : i32
    %c0_i32_0 = arith.constant 0 : i32
    %c0_i32_1 = arith.constant 0 : i32
    return %c0_i32, %c0_i32_0 : i32, i32
  }
  func.func @transform_10(%arg0: i32) -> (i32, i32, i32) {
    %c0_i32 = arith.constant 0 : i32
    %c0_i32_0 = arith.constant 0 : i32
    %c0_i32_1 = arith.constant 0 : i32
    return %arg0, %c0_i32, %c0_i32_0 : i32, i32, i32
  }
  func.func @transform_11(%arg0: i32) -> (i32, i32, i32) {
    %c0_i32 = arith.constant 0 : i32
    %c0_i32_0 = arith.constant 0 : i32
    %c0_i32_1 = arith.constant 0 : i32
    return %arg0, %c0_i32, %c0_i32_0 : i32, i32, i32
  }
}

</mosaic_0001>

<llo_original>
// kernel: structural_feature_space_forward.1
$region0: #{structural_feature_space_forward.1}
  #allocation0 [shape = 'u32[]', space=smem, size = 0x4, offset = 0x4, fixed_abs, tag = 'smem constant byte address 0x4 - core index']
  #allocation1 [shape = 'u32[72,128]{1,0:T(1,128)}', space=vmem, size = 0x9000, scoped, tag = 'internal scratch']
  #allocation2 [shape = 'f32[1,1]{1,0:T(1,128)S(6)}', space=smem, size = 0x200, scoped, tag = 'scoped memory for structural_feature_space_forward.1']
  %s0 = inlined_call_operand.<no memory space> [shape: f32[1,1], index: 0, kind: input, shape index: {}]
  %s1 = inlined_call_operand.vmem [shape: f32[4,4,16], index: 1, kind: input, shape index: {}]
  %s2 = inlined_call_operand.vmem [shape: f32[4,1,128], index: 2, kind: input, shape index: {}]
  %s3 = inlined_call_operand.vmem [shape: f32[16,128], index: 3, kind: input, shape index: {}]
  %s4 = inlined_call_operand.vmem [shape: f32[32,4], index: 4, kind: input, shape index: {}]
  %s5 = inlined_call_operand.vmem [shape: f32[32,1], index: 5, kind: input, shape index: {}]
  %s6 = inlined_call_operand.vmem [shape: f32[32,32], index: 6, kind: input, shape index: {}]
  %s7 = inlined_call_operand.vmem [shape: f32[32,1], index: 7, kind: input, shape index: {}]
  %s8 = inlined_call_operand.vmem [shape: f32[4,32], index: 8, kind: input, shape index: {}]
  %s9 = inlined_call_operand.vmem [shape: f32[4,1], index: 9, kind: input, shape index: {}]
  %s10 = inlined_call_operand.hbm [shape: f32[4,1,128], index: 10, kind: output, shape index: {0}]
  %s11 = inlined_call_operand.hbm [shape: f32[4,1,128], index: 11, kind: output, shape index: {1}]
  %12 = xla_tuple %s10, %s11
  %s13 = sld [smem:[#allocation0]]
  $region81: #{structural_feature_space_forward.1} parent=0
    _
  %s15 = ssub.s32 1, %s13
  %s16 = scalar_select 0, %s15, %s13
  %17 = sst [smem:[#allocation2]] %s0
  $region1: #{structural_feature_space_forward.1} parent=0
    #allocation3 [shape = 'u8[1024]{0}', space=vmem, size = 0x400, scoped, tag = 'output window, operand 0']
    #allocation4 [shape = 's32[2]{0}', space=sflag, size = 0x8, scoped, tag = 'scoped memory for structural_feature_space_forward.1']
    #allocation5 [shape = 'u8[1024]{0}', space=vmem, size = 0x400, scoped, tag = 'output window, operand 1']
    #allocation6 [shape = 's32[2]{0}', space=sflag, size = 0x8, scoped, tag = 'scoped memory for structural_feature_space_forward.1']
    %18 = vsyncpa [#allocation4], 0
    %s19 = scalar_lea.sflag [#allocation4], 1
    %20 = vsyncpa %s19, 0
    %21 = vsyncpa [#allocation6], 0
    %s22 = scalar_lea.sflag [#allocation6], 1
    %23 = vsyncpa %s22, 0
    loop: start=0, step=1, limit=6
    $region2: #{structural_feature_space_forward.1} parent=1 // loop_pre_header
      _
    $region3: #{structural_feature_space_forward.1} parent=1 // loop_header
      %s25 = sphi 0, %s29
      %p26 = scmp.ge.s32.totalorder %s25, 6
      %s33 = sphi 0, %s33
      %s35 = sphi 0, %s33
      %s36 = sphi 0, %s35
      %s50 = sphi 0, %s36
      %s56 = sphi 0, %s58
      %s59 = sphi 0, %s56
      %s60 = sphi 0, %s59
      %s76 = sphi 0, %s60
      %s82 = sphi 0, %s84
      %s85 = sphi 0, %s82
      %s86 = sphi 0, %s85
      %s102 = sphi 0, %s86
      %s106 = sphi 0, %s106
      %s108 = sphi 0, %s106
      %s109 = sphi 0, %s108
      %s123 = sphi 0, %s109
      %s127 = sphi 0, %s127
      %s129 = sphi 0, %s127
      %s130 = sphi 0, %s129
      %s144 = sphi 0, %s130
      %s148 = sphi 0, %s148
      %s150 = sphi 0, %s148
      %s151 = sphi 0, %s150
      %s165 = sphi 0, %s151
      %s169 = sphi 0, %s169
      %s171 = sphi 0, %s169
      %s172 = sphi 0, %s171
      %s186 = sphi 0, %s172
      %s190 = sphi 0, %s190
      %s192 = sphi 0, %s190
      %s193 = sphi 0, %s192
      %s207 = sphi 0, %s193
      %s211 = sphi 0, %s211
      %s213 = sphi 0, %s211
      %s214 = sphi 0, %s213
      %s228 = sphi 0, %s214
      %s232 = sphi 0, %s232
      %s234 = sphi 0, %s232
      %s235 = sphi 0, %s234
      %s249 = sphi 0, %s235
      %s255 = sphi 0, %s257
      %s258 = sphi 0, %s255
      %s259 = sphi 0, %s258
      %s275 = sphi 0, %s259
      %s281 = sphi 0, %s283
      %s284 = sphi 0, %s281
      %s285 = sphi 0, %s284
      %s301 = sphi 0, %s285
    $region4: #{structural_feature_space_forward.1} parent=1 // loop_header_branch
      %28 = sbr.rel (%p26) target = $region8
    $region5: #{structural_feature_space_forward.1} parent=1 // loop_body
      %s30 = ssub.s32 %s25, 1
      %s31 = ssub.s32 %s25, 2
      %s32 = sadd.s32 %s25, 1
      %s34 = sadd.s32 %s33, 1
      %p37 = scmp.eq.s32.totalorder %s25, 3
      %p38 = scmp.ne.s32.totalorder %s33, %s35
      %p39 = scmp.eq.s32.totalorder %s25, 0
      %p40 = por %p38, %p39
      %p41 = scmp.ne.s32.totalorder %s33, %s35
      %p42 = scmp.eq.s32.totalorder %s30, 3
      %p43 = por %p41, %p42
      %p44 = scmp.ne.s32.totalorder %s35, %s36
      %p45 = scmp.eq.s32.totalorder %s30, 0
      %p46 = por %p44, %p45
      %p47 = scmp.ne.s32.totalorder %s35, %s36
      %p48 = scmp.eq.s32.totalorder %s31, 3
      %p49 = por %p47, %p48
      %p51 = scmp.ne.s32.totalorder %s36, %s50
      %p52 = scmp.eq.s32.totalorder %s31, 0
      %p53 = por %p51, %p52
      %s54 = ssub.s32 %s25, %s32
      %p55 = scmp.eq.s32.totalorder %s54, 0
      %s57 = sadd.s32 %s56, 1
      %s58 = scalar_select %p55, %s56, %s57
      %p61 = pneg %p55
      %p62 = scmp.eq.s32.totalorder %s25, 3
      %p63 = por %p61, %p62
      %p64 = scmp.ne.s32.totalorder %s56, %s59
      %p65 = scmp.eq.s32.totalorder %s25, 0
      %p66 = por %p64, %p65
      %p67 = scmp.ne.s32.totalorder %s56, %s59
      %p68 = scmp.eq.s32.totalorder %s30, 3
      %p69 = por %p67, %p68
      %p70 = scmp.ne.s32.totalorder %s59, %s60
      %p71 = scmp.eq.s32.totalorder %s30, 0
      %p72 = por %p70, %p71
      %p73 = scmp.ne.s32.totalorder %s59, %s60
      %p74 = scmp.eq.s32.totalorder %s31, 3
      %p75 = por %p73, %p74
      %p77 = scmp.ne.s32.totalorder %s60, %s76
      %p78 = scmp.eq.s32.totalorder %s31, 0
      %p79 = por %p77, %p78
      %s80 = ssub.s32 %s25, %s32
      %p81 = scmp.eq.s32.totalorder %s80, 0
      %s83 = sadd.s32 %s82, 1
      %s84 = scalar_select %p81, %s82, %s83
      %p87 = pneg %p81
      %p88 = scmp.eq.s32.totalorder %s25, 3
      %p89 = por %p87, %p88
      %p90 = scmp.ne.s32.totalorder %s82, %s85
      %p91 = scmp.eq.s32.totalorder %s25, 0
      %p92 = por %p90, %p91
      %p93 = scmp.ne.s32.totalorder %s82, %s85
      %p94 = scmp.eq.s32.totalorder %s30, 3
      %p95 = por %p93, %p94
      %p96 = scmp.ne.s32.totalorder %s85, %s86
      %p97 = scmp.eq.s32.totalorder %s30, 0
      %p98 = por %p96, %p97
      %p99 = scmp.ne.s32.totalorder %s85, %s86
      %p100 = scmp.eq.s32.totalorder %s31, 3
      %p101 = por %p99, %p100
      %p103 = scmp.ne.s32.totalorder %s86, %s102
      %p104 = scmp.eq.s32.totalorder %s31, 0
      %p105 = por %p103, %p104
      %s107 = sadd.s32 %s106, 1
      %p110 = scmp.eq.s32.totalorder %s25, 3
      %p111 = scmp.ne.s32.totalorder %s106, %s108
      %p112 = scmp.eq.s32.totalorder %s25, 0
      %p113 = por %p111, %p112
      %p114 = scmp.ne.s32.totalorder %s106, %s108
      %p115 = scmp.eq.s32.totalorder %s30, 3
      %p116 = por %p114, %p115
      %p117 = scmp.ne.s32.totalorder %s108, %s109
      %p118 = scmp.eq.s32.totalorder %s30, 0
      %p119 = por %p117, %p118
      %p120 = scmp.ne.s32.totalorder %s108, %s109
      %p121 = scmp.eq.s32.totalorder %s31, 3
      %p122 = por %p120, %p121
      %p124 = scmp.ne.s32.totalorder %s109, %s123
      %p125 = scmp.eq.s32.totalorder %s31, 0
      %p126 = por %p124, %p125
      %s128 = sadd.s32 %s127, 1
      %p131 = scmp.eq.s32.totalorder %s25, 3
      %p132 = scmp.ne.s32.totalorder %s127, %s129
      %p133 = scmp.eq.s32.totalorder %s25, 0
      %p134 = por %p132, %p133
      %p135 = scmp.ne.s32.totalorder %s127, %s129
      %p136 = scmp.eq.s32.totalorder %s30, 3
      %p137 = por %p135, %p136
      %p138 = scmp.ne.s32.totalorder %s129, %s130
      %p139 = scmp.eq.s32.totalorder %s30, 0
      %p140 = por %p138, %p139
      %p141 = scmp.ne.s32.totalorder %s129, %s130
      %p142 = scmp.eq.s32.totalorder %s31, 3
      %p143 = por %p141, %p142
      %p145 = scmp.ne.s32.totalorder %s130, %s144
      %p146 = scmp.eq.s32.totalorder %s31, 0
      %p147 = por %p145, %p146
      %s149 = sadd.s32 %s148, 1
      %p152 = scmp.eq.s32.totalorder %s25, 3
      %p153 = scmp.ne.s32.totalorder %s148, %s150
      %p154 = scmp.eq.s32.totalorder %s25, 0
      %p155 = por %p153, %p154
      %p156 = scmp.ne.s32.totalorder %s148, %s150
      %p157 = scmp.eq.s32.totalorder %s30, 3
      %p158 = por %p156, %p157
      %p159 = scmp.ne.s32.totalorder %s150, %s151
      %p160 = scmp.eq.s32.totalorder %s30, 0
      %p161 = por %p159, %p160
      %p162 = scmp.ne.s32.totalorder %s150, %s151
      %p163 = scmp.eq.s32.totalorder %s31, 3
      %p164 = por %p162, %p163
      %p166 = scmp.ne.s32.totalorder %s151, %s165
      %p167 = scmp.eq.s32.totalorder %s31, 0
      %p168 = por %p166, %p167
      %s170 = sadd.s32 %s169, 1
      %p173 = scmp.eq.s32.totalorder %s25, 3
      %p174 = scmp.ne.s32.totalorder %s169, %s171
      %p175 = scmp.eq.s32.totalorder %s25, 0
      %p176 = por %p174, %p175
      %p177 = scmp.ne.s32.totalorder %s169, %s171
      %p178 = scmp.eq.s32.totalorder %s30, 3
      %p179 = por %p177, %p178
      %p180 = scmp.ne.s32.totalorder %s171, %s172
      %p181 = scmp.eq.s32.totalorder %s30, 0
      %p182 = por %p180, %p181
      %p183 = scmp.ne.s32.totalorder %s171, %s172
      %p184 = scmp.eq.s32.totalorder %s31, 3
      %p185 = por %p183, %p184
      %p187 = scmp.ne.s32.totalorder %s172, %s186
      %p188 = scmp.eq.s32.totalorder %s31, 0
      %p189 = por %p187, %p188
      %s191 = sadd.s32 %s190, 1
      %p194 = scmp.eq.s32.totalorder %s25, 3
      %p195 = scmp.ne.s32.totalorder %s190, %s192
      %p196 = scmp.eq.s32.totalorder %s25, 0
      %p197 = por %p195, %p196
      %p198 = scmp.ne.s32.totalorder %s190, %s192
      %p199 = scmp.eq.s32.totalorder %s30, 3
      %p200 = por %p198, %p199
      %p201 = scmp.ne.s32.totalorder %s192, %s193
      %p202 = scmp.eq.s32.totalorder %s30, 0
      %p203 = por %p201, %p202
      %p204 = scmp.ne.s32.totalorder %s192, %s193
      %p205 = scmp.eq.s32.totalorder %s31, 3
      %p206 = por %p204, %p205
      %p208 = scmp.ne.s32.totalorder %s193, %s207
      %p209 = scmp.eq.s32.totalorder %s31, 0
      %p210 = por %p208, %p209
      %s212 = sadd.s32 %s211, 1
      %p215 = scmp.eq.s32.totalorder %s25, 3
      %p216 = scmp.ne.s32.totalorder %s211, %s213
      %p217 = scmp.eq.s32.totalorder %s25, 0
      %p218 = por %p216, %p217
      %p219 = scmp.ne.s32.totalorder %s211, %s213
      %p220 = scmp.eq.s32.totalorder %s30, 3
      %p221 = por %p219, %p220
      %p222 = scmp.ne.s32.totalorder %s213, %s214
      %p223 = scmp.eq.s32.totalorder %s30, 0
      %p224 = por %p222, %p223
      %p225 = scmp.ne.s32.totalorder %s213, %s214
      %p226 = scmp.eq.s32.totalorder %s31, 3
      %p227 = por %p225, %p226
      %p229 = scmp.ne.s32.totalorder %s214, %s228
      %p230 = scmp.eq.s32.totalorder %s31, 0
      %p231 = por %p229, %p230
      %s233 = sadd.s32 %s232, 1
      %p236 = scmp.eq.s32.totalorder %s25, 3
      %p237 = scmp.ne.s32.totalorder %s232, %s234
      %p238 = scmp.eq.s32.totalorder %s25, 0
      %p239 = por %p237, %p238
      %p240 = scmp.ne.s32.totalorder %s232, %s234
      %p241 = scmp.eq.s32.totalorder %s30, 3
      %p242 = por %p240, %p241
      %p243 = scmp.ne.s32.totalorder %s234, %s235
      %p244 = scmp.eq.s32.totalorder %s30, 0
      %p245 = por %p243, %p244
      %p246 = scmp.ne.s32.totalorder %s234, %s235
      %p247 = scmp.eq.s32.totalorder %s31, 3
      %p248 = por %p246, %p247
      %p250 = scmp.ne.s32.totalorder %s235, %s249
      %p251 = scmp.eq.s32.totalorder %s31, 0
      %p252 = por %p250, %p251
      %s253 = ssub.s32 %s25, %s32
      %p254 = scmp.eq.s32.totalorder %s253, 0
      %s256 = sadd.s32 %s255, 1
      %s257 = scalar_select %p254, %s255, %s256
      %p260 = pneg %p254
      %p261 = scmp.eq.s32.totalorder %s25, 3
      %p262 = por %p260, %p261
      %p263 = scmp.ne.s32.totalorder %s255, %s258
      %p264 = scmp.eq.s32.totalorder %s25, 0
      %p265 = por %p263, %p264
      %p266 = scmp.ne.s32.totalorder %s255, %s258
      %p267 = scmp.eq.s32.totalorder %s30, 3
      %p268 = por %p266, %p267
      %p269 = scmp.ne.s32.totalorder %s258, %s259
      %p270 = scmp.eq.s32.totalorder %s30, 0
      %p271 = por %p269, %p270
      %p272 = scmp.ne.s32.totalorder %s258, %s259
      %p273 = scmp.eq.s32.totalorder %s31, 3
      %p274 = por %p272, %p273
      %p276 = scmp.ne.s32.totalorder %s259, %s275
      %p277 = scmp.eq.s32.totalorder %s31, 0
      %p278 = por %p276, %p277
      %s279 = ssub.s32 %s25, %s32
      %p280 = scmp.eq.s32.totalorder %s279, 0
      %s282 = sadd.s32 %s281, 1
      %s283 = scalar_select %p280, %s281, %s282
      %p286 = pneg %p280
      %p287 = scmp.eq.s32.totalorder %s25, 3
      %p288 = por %p286, %p287
      %p289 = scmp.ne.s32.totalorder %s281, %s284
      %p290 = scmp.eq.s32.totalorder %s25, 0
      %p291 = por %p289, %p290
      %p292 = scmp.ne.s32.totalorder %s281, %s284
      %p293 = scmp.eq.s32.totalorder %s30, 3
      %p294 = por %p292, %p293
      %p295 = scmp.ne.s32.totalorder %s284, %s285
      %p296 = scmp.eq.s32.totalorder %s30, 0
      %p297 = por %p295, %p296
      %p298 = scmp.ne.s32.totalorder %s284, %s285
      %p299 = scmp.eq.s32.totalorder %s31, 3
      %p300 = por %p298, %p299
      %p302 = scmp.ne.s32.totalorder %s285, %s301
      %p303 = scmp.eq.s32.totalorder %s31, 0
      %p304 = por %p302, %p303
      %p305 = scmp.le.s32.totalorder 1, %s25
      %p306 = scmp.lt.s32.totalorder %s25, 5
      %p307 = pnand %p305, %p306
      %p308 = pneg %p307
      // Predicated region
      $region9: #{structural_feature_space_forward.1} parent=5 // pred_check
        _
      $region10: #{structural_feature_space_forward.1} parent=5 // pred_check_branch
        %310 = sbr.rel (%p307) target = $region12
      $region11: #{structural_feature_space_forward.1} parent=5 // pred_region
        %s311 = ssub.s32 %s25, 1
        // Predicated region
        $region13: #{structural_feature_space_forward.1} parent=11 // pred_check
          %p312 = pneg %p46
        $region14: #{structural_feature_space_forward.1} parent=11 // pred_check_branch
          %314 = sbr.rel (%p312) target = $region16
        $region15: #{structural_feature_space_forward.1} parent=11 // pred_region
          _
        $region16: #{structural_feature_space_forward.1} parent=11 // pred_fallthru
          _
        // Predicated region
        $region17: #{structural_feature_space_forward.1} parent=11 // pred_check
          %p315 = pneg %p119
        $region18: #{structural_feature_space_forward.1} parent=11 // pred_check_branch
          %317 = sbr.rel (%p315) target = $region20
        $region19: #{structural_feature_space_forward.1} parent=11 // pred_region
          _
        $region20: #{structural_feature_space_forward.1} parent=11 // pred_fallthru
          _
        // Predicated region
        $region21: #{structural_feature_space_forward.1} parent=11 // pred_check
          %p318 = pneg %p140
        $region22: #{structural_feature_space_forward.1} parent=11 // pred_check_branch
          %320 = sbr.rel (%p318) target = $region24
        $region23: #{structural_feature_space_forward.1} parent=11 // pred_region
          _
        $region24: #{structural_feature_space_forward.1} parent=11 // pred_fallthru
          _
        // Predicated region
        $region25: #{structural_feature_space_forward.1} parent=11 // pred_check
          %p321 = pneg %p161
        $region26: #{structural_feature_space_forward.1} parent=11 // pred_check_branch
          %323 = sbr.rel (%p321) target = $region28
        $region27: #{structural_feature_space_forward.1} parent=11 // pred_region
          _
        $region28: #{structural_feature_space_forward.1} parent=11 // pred_fallthru
          _
        // Predicated region
        $region29: #{structural_feature_space_forward.1} parent=11 // pred_check
          %p324 = pneg %p182
        $region30: #{structural_feature_space_forward.1} parent=11 // pred_check_branch
          %326 = sbr.rel (%p324) target = $region32
        $region31: #{structural_feature_space_forward.1} parent=11 // pred_region
          _
        $region32: #{structural_feature_space_forward.1} parent=11 // pred_fallthru
          _
        // Predicated region
        $region33: #{structural_feature_space_forward.1} parent=11 // pred_check
          %p327 = pneg %p203
        $region34: #{structural_feature_space_forward.1} parent=11 // pred_check_branch
          %329 = sbr.rel (%p327) target = $region36
        $region35: #{structural_feature_space_forward.1} parent=11 // pred_region
          _
        $region36: #{structural_feature_space_forward.1} parent=11 // pred_fallthru
          _
        // Predicated region
        $region37: #{structural_feature_space_forward.1} parent=11 // pred_check
          %p330 = pneg %p224
        $region38: #{structural_feature_space_forward.1} parent=11 // pred_check_branch
          %332 = sbr.rel (%p330) target = $region40
        $region39: #{structural_feature_space_forward.1} parent=11 // pred_region
          _
        $region40: #{structural_feature_space_forward.1} parent=11 // pred_fallthru
          _
        // Predicated region
        $region41: #{structural_feature_space_forward.1} parent=11 // pred_check
          %p333 = pneg %p245
        $region42: #{structural_feature_space_forward.1} parent=11 // pred_check_branch
          %335 = sbr.rel (%p333) target = $region44
        $region43: #{structural_feature_space_forward.1} parent=11 // pred_region
          _
        $region44: #{structural_feature_space_forward.1} parent=11 // pred_fallthru
          _
      $region12: #{structural_feature_space_forward.1} parent=5 // pred_fallthru
        _
      %p336 = scmp.lt.s32.totalorder %s25, 4
      // Predicated region
      $region45: #{structural_feature_space_forward.1} parent=5 // pred_check
        %p337 = pneg %p336
      $region46: #{structural_feature_space_forward.1} parent=5 // pred_check_branch
        %339 = sbr.rel (%p337) target = $region48
      $region47: #{structural_feature_space_forward.1} parent=5 // pred_region
        // Predicated region
        $region49: #{structural_feature_space_forward.1} parent=47 // pred_check
          %p340 = pneg %p66
        $region50: #{structural_feature_space_forward.1} parent=47 // pred_check_branch
          %342 = sbr.rel (%p340) target = $region52
        $region51: #{structural_feature_space_forward.1} parent=47 // pred_region
          %p343 = scmp.lt.s32.totalorder %s25, 3
          %s344 = scalar_select %p343, %s25, 3
          %s345 = smul.addr %s344, 4
          %s346 = scalar_lea.vmem %s1, %s345
        $region52: #{structural_feature_space_forward.1} parent=47 // pred_fallthru
          _
        // Predicated region
        $region53: #{structural_feature_space_forward.1} parent=47 // pred_check
          %p347 = pneg %p92
        $region54: #{structural_feature_space_forward.1} parent=47 // pred_check_branch
          %349 = sbr.rel (%p347) target = $region56
        $region55: #{structural_feature_space_forward.1} parent=47 // pred_region
          %p350 = scmp.lt.s32.totalorder %s25, 3
          %s351 = scalar_select %p350, %s25, 3
          %s352 = scalar_lea.vmem %s2, %s351
        $region56: #{structural_feature_space_forward.1} parent=47 // pred_fallthru
          _
      $region48: #{structural_feature_space_forward.1} parent=5 // pred_fallthru
        _
      %p353 = scmp.le.s32.totalorder 1, %s25
      %p354 = scmp.lt.s32.totalorder %s25, 5
      %p355 = pnand %p353, %p354
      %p356 = pneg %p355
      // Predicated region
      $region57: #{structural_feature_space_forward.1} parent=5 // pred_check
        _
      $region58: #{structural_feature_space_forward.1} parent=5 // pred_check_branch
        %358 = sbr.rel (%p355) target = $region60
      $region59: #{structural_feature_space_forward.1} parent=5 // pred_region
        %s359 = ssub.s32 %s25, 1
        %p360 = pneg %p46
        %p361 = pneg %p43
        %p362 = scmp.lt.s32.totalorder %s30, 3
        %s363 = scalar_select %p362, %s30, 3
        %s364 = smul.addr %s363, 4
        %s365 = scalar_lea.vmem %s1, %s364
        %p366 = pneg %p72
        %p367 = pneg %p69
        %p368 = scmp.lt.s32.totalorder %s30, 3
        %s369 = scalar_select %p368, %s30, 3
        %s370 = scalar_lea.vmem %s2, %s369
        %p371 = pneg %p98
        %p372 = pneg %p95
        %p373 = pneg %p119
        %p374 = pneg %p116
        %p375 = pneg %p140
        %p376 = pneg %p137
        %p377 = pneg %p161
        %p378 = pneg %p158
        %p379 = pneg %p182
        %p380 = pneg %p179
        %p381 = pneg %p203
        %p382 = pneg %p200
        %p383 = pneg %p224
        %p384 = pneg %p221
        %p385 = pneg %p245
        %p386 = pneg %p242
        %p387 = pneg %p271
        %p388 = pneg %p268
        %s389 = sand.u32 %s258, 1
        %s390 = scalar_lea.sflag [#allocation4], %s389
        %s391 = sand.u32 %s258, 1
        %s392 = scalar_lea.vmem [#allocation3], %s391
        %p393 = pneg %p297
        %p394 = pneg %p294
        %s395 = sand.u32 %s284, 1
        %s396 = scalar_lea.sflag [#allocation6], %s395
        %s397 = sand.u32 %s284, 1
        %s398 = scalar_lea.vmem [#allocation5], %s397
        %p399 = scmp.lt.s32.totalorder %s30, 3
        %s400 = scalar_select %p399, %s30, 3
        %s401 = smul.addr %s400, 4
        %s402 = scalar_lea.vmem %s1, %s401
        %p403 = scmp.lt.s32.totalorder %s30, 3
        %s404 = scalar_select %p403, %s30, 3
        %s405 = scalar_lea.vmem %s2, %s404
        %s406 = sld [smem:[#allocation2]]
        %v407 = vld [vmem:[%s405] sm:$0x1]
        %v408 = vstv %s406
        %v409 = vsub.f32 %v407, %v408
        %410 = vst [vmem:[%s392] sm:$0x1] %v409
        %v411 = vld [vmem:[%s402] sm:$0xf]
        %v412 = vld [vmem:[%s4] sm:$0xff]
        %v413 = vld [vmem:[%s4 + $0x8] sm:$0xff]
        %v414 = vld [vmem:[%s4 + $0x10] sm:$0xff]
        %v415 = vld [vmem:[%s4 + $0x18] sm:$0xff]
        %v416 = vld [vmem:[%s5] sm:$0xff]
        %v417 = vld [vmem:[%s5 + $0x8] sm:$0xff]
        %v418 = vld [vmem:[%s5 + $0x10] sm:$0xff]
        %v419 = vld [vmem:[%s5 + $0x18] sm:$0xff]
        %421 = vset.pattern.permute.xlu0 0
        %422 = vperm.xlu0 %421, %v416
        %v423 = vpop.permute.xlu0 %422
        %426 = vset.pattern.permute.xlu0 0
        %427 = vperm.xlu0 %426, %v417
        %v428 = vpop.permute.xlu0 %427
        %431 = vset.pattern.permute.xlu0 0
        %432 = vperm.xlu0 %431, %v418
        %v433 = vpop.permute.xlu0 %432
        %436 = vset.pattern.permute.xlu0 0
        %437 = vperm.xlu0 %436, %v419
        %v438 = vpop.permute.xlu0 %437
        %vm440 = vcmask 31744
        %v442 = vsel %vm440, %v412, 0
        %v445 = vsel %vm440, %v413, 0
        %v448 = vsel %vm440, %v414, 0
        %v451 = vsel %vm440, %v415, 0
        %vm453 = vcmask 1043456
        %v455 = vsel %vm453, %v411, 0
        %457 = vmatpush.msra.mxu0 0.0
        %458 = vmatpush.msra.mxu0 0.0
        %459 = vmatpush.msra.mxu0 0.0
        %460 = vmatpush.msra.mxu0 0.0
        %461 = vmatpush.msra.mxu0 0.0
        %462 = vmatpush.msra.mxu0 0.0
        %463 = vmatpush.msra.mxu0 0.0
        %464 = vmatpush.msra.mxu0 0.0
        %465 = vmatpush.msra.mxu0 0.0
        %466 = vmatpush.msra.mxu0 0.0
        %467 = vmatpush.msra.mxu0 0.0
        %468 = vmatpush.msra.mxu0 0.0
        %469 = vmatpush.msra.mxu0 0.0
        %470 = vmatpush.msra.mxu0 0.0
        %471 = vmatpush.msra.mxu0 0.0
        %v472 = vand.u32 %v455, 4294901760
        %473 = vmatpush.msra.mxu0 %v472
        %v474 = vand.u32 %v442, 4294901760
        %v475 = vsub.f32 %v442, %v474
        %v476 = vand.u32 %v475, 4294901760
        %v477 = vsub.f32 %v475, %v476
        %v478 = vand.u32 %v477, 4294901760
        %479 = vmatmul.f32.gmra.mxu0 %v478
        %v480 = vpop.f32.mrf.mxu0
        %v481 = vadd.f32 %v423, %v480
        %v482 = vand.u32 %v445, 4294901760
        %v483 = vsub.f32 %v445, %v482
        %v484 = vand.u32 %v483, 4294901760
        %v485 = vsub.f32 %v483, %v484
        %v486 = vand.u32 %v485, 4294901760
        %487 = vmatmul.f32.gmra.mxu0 %v486
        %v488 = vpop.f32.mrf.mxu0
        %v489 = vadd.f32 %v428, %v488
        %v490 = vand.u32 %v448, 4294901760
        %v491 = vsub.f32 %v448, %v490
        %v492 = vand.u32 %v491, 4294901760
        %v493 = vsub.f32 %v491, %v492
        %v494 = vand.u32 %v493, 4294901760
        %495 = vmatmul.f32.gmra.mxu0 %v494
        %v496 = vpop.f32.mrf.mxu0
        %v497 = vadd.f32 %v433, %v496
        %v498 = vand.u32 %v451, 4294901760
        %v499 = vsub.f32 %v451, %v498
        %v500 = vand.u32 %v499, 4294901760
        %v501 = vsub.f32 %v499, %v500
        %v502 = vand.u32 %v501, 4294901760
        %503 = vmatmul.f32.gmra.mxu0 %v502
        %v504 = vpop.f32.mrf.mxu0
        %v505 = vadd.f32 %v438, %v504
        %506 = vdwg.mxu0
        %507 = vmatpush.msra.mxu0 0.0
        %508 = vmatpush.msra.mxu0 0.0
        %509 = vmatpush.msra.mxu0 0.0
        %510 = vmatpush.msra.mxu0 0.0
        %511 = vmatpush.msra.mxu0 0.0
        %512 = vmatpush.msra.mxu0 0.0
        %513 = vmatpush.msra.mxu0 0.0
        %514 = vmatpush.msra.mxu0 0.0
        %515 = vmatpush.msra.mxu0 0.0
        %516 = vmatpush.msra.mxu0 0.0
        %517 = vmatpush.msra.mxu0 0.0
        %518 = vmatpush.msra.mxu0 0.0
        %519 = vmatpush.msra.mxu0 0.0
        %520 = vmatpush.msra.mxu0 0.0
        %521 = vmatpush.msra.mxu0 0.0
        %v522 = vand.u32 %v455, 4294901760
        %v523 = vsub.f32 %v455, %v522
        %v524 = vand.u32 %v523, 4294901760
        %v525 = vsub.f32 %v523, %v524
        %v526 = vand.u32 %v525, 4294901760
        %527 = vmatpush.msra.mxu0 %v526
        %v528 = vand.u32 %v442, 4294901760
        %529 = vmatmul.f32.gmra.mxu0 %v528
        %v530 = vpop.f32.mrf.mxu0
        %v531 = vadd.f32 %v481, %v530
        %v532 = vand.u32 %v445, 4294901760
        %533 = vmatmul.f32.gmra.mxu0 %v532
        %v534 = vpop.f32.mrf.mxu0
        %v535 = vadd.f32 %v489, %v534
        %v536 = vand.u32 %v448, 4294901760
        %537 = vmatmul.f32.gmra.mxu0 %v536
        %v538 = vpop.f32.mrf.mxu0
        %v539 = vadd.f32 %v497, %v538
        %v540 = vand.u32 %v451, 4294901760
        %541 = vmatmul.f32.gmra.mxu0 %v540
        %v542 = vpop.f32.mrf.mxu0
        %v543 = vadd.f32 %v505, %v542
        %544 = vdwg.mxu0
        %545 = vmatpush.msra.mxu0 0.0
        %546 = vmatpush.msra.mxu0 0.0
        %547 = vmatpush.msra.mxu0 0.0
        %548 = vmatpush.msra.mxu0 0.0
        %549 = vmatpush.msra.mxu0 0.0
        %550 = vmatpush.msra.mxu0 0.0
        %551 = vmatpush.msra.mxu0 0.0
        %552 = vmatpush.msra.mxu0 0.0
        %553 = vmatpush.msra.mxu0 0.0
        %554 = vmatpush.msra.mxu0 0.0
        %555 = vmatpush.msra.mxu0 0.0
        %556 = vmatpush.msra.mxu0 0.0
        %557 = vmatpush.msra.mxu0 0.0
        %558 = vmatpush.msra.mxu0 0.0
        %559 = vmatpush.msra.mxu0 0.0
        %v560 = vand.u32 %v455, 4294901760
        %v561 = vsub.f32 %v455, %v560
        %562 = vmatpush.msra.mxu0 %v561
        %v563 = vand.u32 %v442, 4294901760
        %v564 = vsub.f32 %v442, %v563
        %565 = vmatmul.f32.gmra.mxu0 %v564
        %v566 = vpop.f32.mrf.mxu0
        %v567 = vadd.f32 %v531, %v566
        %v568 = vand.u32 %v445, 4294901760
        %v569 = vsub.f32 %v445, %v568
        %570 = vmatmul.f32.gmra.mxu0 %v569
        %v571 = vpop.f32.mrf.mxu0
        %v572 = vadd.f32 %v535, %v571
        %v573 = vand.u32 %v448, 4294901760
        %v574 = vsub.f32 %v448, %v573
        %575 = vmatmul.f32.gmra.mxu0 %v574
        %v576 = vpop.f32.mrf.mxu0
        %v577 = vadd.f32 %v539, %v576
        %v578 = vand.u32 %v451, 4294901760
        %v579 = vsub.f32 %v451, %v578
        %580 = vmatmul.f32.gmra.mxu0 %v579
        %v581 = vpop.f32.mrf.mxu0
        %v582 = vadd.f32 %v543, %v581
        %583 = vdwg.mxu0
        %584 = vmatpush.msra.mxu0 0.0
        %585 = vmatpush.msra.mxu0 0.0
        %586 = vmatpush.msra.mxu0 0.0
        %587 = vmatpush.msra.mxu0 0.0
        %588 = vmatpush.msra.mxu0 0.0
        %589 = vmatpush.msra.mxu0 0.0
        %590 = vmatpush.msra.mxu0 0.0
        %591 = vmatpush.msra.mxu0 0.0
        %592 = vmatpush.msra.mxu0 0.0
        %593 = vmatpush.msra.mxu0 0.0
        %594 = vmatpush.msra.mxu0 0.0
        %595 = vmatpush.msra.mxu0 0.0
        %596 = vmatpush.msra.mxu0 0.0
        %597 = vmatpush.msra.mxu0 0.0
        %598 = vmatpush.msra.mxu0 0.0
        %v599 = vand.u32 %v455, 4294901760
        %600 = vmatpush.msra.mxu0 %v599
        %v601 = vand.u32 %v442, 4294901760
        %v602 = vsub.f32 %v442, %v601
        %v603 = vand.u32 %v602, 4294901760
        %604 = vmatmul.f32.gmra.mxu0 %v603
        %v605 = vpop.f32.mrf.mxu0
        %v606 = vadd.f32 %v567, %v605
        %v607 = vand.u32 %v445, 4294901760
        %v608 = vsub.f32 %v445, %v607
        %v609 = vand.u32 %v608, 4294901760
        %610 = vmatmul.f32.gmra.mxu0 %v609
        %v611 = vpop.f32.mrf.mxu0
        %v612 = vadd.f32 %v572, %v611
        %v613 = vand.u32 %v448, 4294901760
        %v614 = vsub.f32 %v448, %v613
        %v615 = vand.u32 %v614, 4294901760
        %616 = vmatmul.f32.gmra.mxu0 %v615
        %v617 = vpop.f32.mrf.mxu0
        %v618 = vadd.f32 %v577, %v617
        %v619 = vand.u32 %v451, 4294901760
        %v620 = vsub.f32 %v451, %v619
        %v621 = vand.u32 %v620, 4294901760
        %622 = vmatmul.f32.gmra.mxu0 %v621
        %v623 = vpop.f32.mrf.mxu0
        %v624 = vadd.f32 %v582, %v623
        %625 = vdwg.mxu0
        %626 = vmatpush.msra.mxu0 0.0
        %627 = vmatpush.msra.mxu0 0.0
        %628 = vmatpush.msra.mxu0 0.0
        %629 = vmatpush.msra.mxu0 0.0
        %630 = vmatpush.msra.mxu0 0.0
        %631 = vmatpush.msra.mxu0 0.0
        %632 = vmatpush.msra.mxu0 0.0
        %633 = vmatpush.msra.mxu0 0.0
        %634 = vmatpush.msra.mxu0 0.0
        %635 = vmatpush.msra.mxu0 0.0
        %636 = vmatpush.msra.mxu0 0.0
        %637 = vmatpush.msra.mxu0 0.0
        %638 = vmatpush.msra.mxu0 0.0
        %639 = vmatpush.msra.mxu0 0.0
        %640 = vmatpush.msra.mxu0 0.0
        %v641 = vand.u32 %v455, 4294901760
        %v642 = vsub.f32 %v455, %v641
        %v643 = vand.u32 %v642, 4294901760
        %644 = vmatpush.msra.mxu0 %v643
        %v645 = vand.u32 %v442, 4294901760
        %646 = vmatmul.f32.gmra.mxu0 %v645
        %v647 = vpop.f32.mrf.mxu0
        %v648 = vadd.f32 %v606, %v647
        %v649 = vand.u32 %v445, 4294901760
        %650 = vmatmul.f32.gmra.mxu0 %v649
        %v651 = vpop.f32.mrf.mxu0
        %v652 = vadd.f32 %v612, %v651
        %v653 = vand.u32 %v448, 4294901760
        %654 = vmatmul.f32.gmra.mxu0 %v653
        %v655 = vpop.f32.mrf.mxu0
        %v656 = vadd.f32 %v618, %v655
        %v657 = vand.u32 %v451, 4294901760
        %658 = vmatmul.f32.gmra.mxu0 %v657
        %v659 = vpop.f32.mrf.mxu0
        %v660 = vadd.f32 %v624, %v659
        %661 = vdwg.mxu0
        %662 = vmatpush.msra.mxu0 0.0
        %663 = vmatpush.msra.mxu0 0.0
        %664 = vmatpush.msra.mxu0 0.0
        %665 = vmatpush.msra.mxu0 0.0
        %666 = vmatpush.msra.mxu0 0.0
        %667 = vmatpush.msra.mxu0 0.0
        %668 = vmatpush.msra.mxu0 0.0
        %669 = vmatpush.msra.mxu0 0.0
        %670 = vmatpush.msra.mxu0 0.0
        %671 = vmatpush.msra.mxu0 0.0
        %672 = vmatpush.msra.mxu0 0.0
        %673 = vmatpush.msra.mxu0 0.0
        %674 = vmatpush.msra.mxu0 0.0
        %675 = vmatpush.msra.mxu0 0.0
        %676 = vmatpush.msra.mxu0 0.0
        %v677 = vand.u32 %v455, 4294901760
        %678 = vmatpush.msra.mxu0 %v677
        %v679 = vand.u32 %v442, 4294901760
        %680 = vmatmul.f32.gmra.mxu0 %v679
        %v681 = vpop.f32.mrf.mxu0
        %v682 = vadd.f32 %v648, %v681
        %v683 = vand.u32 %v445, 4294901760
        %684 = vmatmul.f32.gmra.mxu0 %v683
        %v685 = vpop.f32.mrf.mxu0
        %v686 = vadd.f32 %v652, %v685
        %v687 = vand.u32 %v448, 4294901760
        %688 = vmatmul.f32.gmra.mxu0 %v687
        %v689 = vpop.f32.mrf.mxu0
        %v690 = vadd.f32 %v656, %v689
        %v691 = vand.u32 %v451, 4294901760
        %692 = vmatmul.f32.gmra.mxu0 %v691
        %v693 = vpop.f32.mrf.mxu0
        %v694 = vadd.f32 %v660, %v693
        %695 = vdwg.mxu0
        %v696 = vmax.f32 %v682, 0.0
        %v697 = vmax.f32 %v686, 0.0
        %v698 = vmax.f32 %v690, 0.0
        %v699 = vmax.f32 %v694, 0.0
        %v700 = vld [vmem:[%s6] sm:$0xff]
        %v701 = vld [vmem:[%s6 + $0x8] sm:$0xff]
        %v702 = vld [vmem:[%s6 + $0x10] sm:$0xff]
        %v703 = vld [vmem:[%s6 + $0x18] sm:$0xff]
        %v704 = vld [vmem:[%s7] sm:$0xff]
        %v705 = vld [vmem:[%s7 + $0x8] sm:$0xff]
        %v706 = vld [vmem:[%s7 + $0x10] sm:$0xff]
        %v707 = vld [vmem:[%s7 + $0x18] sm:$0xff]
        %709 = vset.pattern.permute.xlu0 0
        %710 = vperm.xlu0 %709, %v704
        %v711 = vpop.permute.xlu0 %710
        %714 = vset.pattern.permute.xlu0 0
        %715 = vperm.xlu0 %714, %v705
        %v716 = vpop.permute.xlu0 %715
        %719 = vset.pattern.permute.xlu0 0
        %720 = vperm.xlu0 %719, %v706
        %v721 = vpop.permute.xlu0 %720
        %724 = vset.pattern.permute.xlu0 0
        %725 = vperm.xlu0 %724, %v707
        %v726 = vpop.permute.xlu0 %725
        %vm728 = vcmask 261120
        %v730 = vsel %vm728, %v700, 0
        %v733 = vsel %vm728, %v701, 0
        %v736 = vsel %vm728, %v702, 0
        %v739 = vsel %vm728, %v703, 0
        %741 = vmatpush.msra.mxu0 0.0
        %742 = vmatpush.msra.mxu0 0.0
        %743 = vmatpush.msra.mxu0 0.0
        %744 = vmatpush.msra.mxu0 0.0
        %745 = vmatpush.msra.mxu0 0.0
        %746 = vmatpush.msra.mxu0 0.0
        %747 = vmatpush.msra.mxu0 0.0
        %748 = vmatpush.msra.mxu0 0.0
        %749 = vmatpush.msra.mxu0 0.0
        %750 = vmatpush.msra.mxu0 0.0
        %751 = vmatpush.msra.mxu0 0.0
        %752 = vmatpush.msra.mxu0 0.0
        %v753 = vand.u32 %v699, 4294901760
        %754 = vmatpush.msra.mxu0 %v753
        %v755 = vand.u32 %v698, 4294901760
        %756 = vmatpush.msra.mxu0 %v755
        %v757 = vand.u32 %v697, 4294901760
        %758 = vmatpush.msra.mxu0 %v757
        %v759 = vand.u32 %v696, 4294901760
        %760 = vmatpush.msra.mxu0 %v759
        %v761 = vand.u32 %v730, 4294901760
        %v762 = vsub.f32 %v730, %v761
        %v763 = vand.u32 %v762, 4294901760
        %v764 = vsub.f32 %v762, %v763
        %v765 = vand.u32 %v764, 4294901760
        %766 = vmatmul.f32.gmra.mxu0 %v765
        %v767 = vpop.f32.mrf.mxu0
        %v768 = vadd.f32 %v711, %v767
        %v769 = vand.u32 %v733, 4294901760
        %v770 = vsub.f32 %v733, %v769
        %v771 = vand.u32 %v770, 4294901760
        %v772 = vsub.f32 %v770, %v771
        %v773 = vand.u32 %v772, 4294901760
        %774 = vmatmul.f32.gmra.mxu0 %v773
        %v775 = vpop.f32.mrf.mxu0
        %v776 = vadd.f32 %v716, %v775
        %v777 = vand.u32 %v736, 4294901760
        %v778 = vsub.f32 %v736, %v777
        %v779 = vand.u32 %v778, 4294901760
        %v780 = vsub.f32 %v778, %v779
        %v781 = vand.u32 %v780, 4294901760
        %782 = vmatmul.f32.gmra.mxu0 %v781
        %v783 = vpop.f32.mrf.mxu0
        %v784 = vadd.f32 %v721, %v783
        %v785 = vand.u32 %v739, 4294901760
        %v786 = vsub.f32 %v739, %v785
        %v787 = vand.u32 %v786, 4294901760
        %v788 = vsub.f32 %v786, %v787
        %v789 = vand.u32 %v788, 4294901760
        %790 = vmatmul.f32.gmra.mxu0 %v789
        %v791 = vpop.f32.mrf.mxu0
        %v792 = vadd.f32 %v726, %v791
        %793 = vdwg.mxu0
        %794 = vmatpush.msra.mxu0 0.0
        %795 = vmatpush.msra.mxu0 0.0
        %796 = vmatpush.msra.mxu0 0.0
        %797 = vmatpush.msra.mxu0 0.0
        %798 = vmatpush.msra.mxu0 0.0
        %799 = vmatpush.msra.mxu0 0.0
        %800 = vmatpush.msra.mxu0 0.0
        %801 = vmatpush.msra.mxu0 0.0
        %802 = vmatpush.msra.mxu0 0.0
        %803 = vmatpush.msra.mxu0 0.0
        %804 = vmatpush.msra.mxu0 0.0
        %805 = vmatpush.msra.mxu0 0.0
        %v806 = vand.u32 %v699, 4294901760
        %v807 = vsub.f32 %v699, %v806
        %v808 = vand.u32 %v807, 4294901760
        %v809 = vsub.f32 %v807, %v808
        %v810 = vand.u32 %v809, 4294901760
        %811 = vmatpush.msra.mxu0 %v810
        %v812 = vand.u32 %v698, 4294901760
        %v813 = vsub.f32 %v698, %v812
        %v814 = vand.u32 %v813, 4294901760
        %v815 = vsub.f32 %v813, %v814
        %v816 = vand.u32 %v815, 4294901760
        %817 = vmatpush.msra.mxu0 %v816
        %v818 = vand.u32 %v697, 4294901760
        %v819 = vsub.f32 %v697, %v818
        %v820 = vand.u32 %v819, 4294901760
        %v821 = vsub.f32 %v819, %v820
        %v822 = vand.u32 %v821, 4294901760
        %823 = vmatpush.msra.mxu0 %v822
        %v824 = vand.u32 %v696, 4294901760
        %v825 = vsub.f32 %v696, %v824
        %v826 = vand.u32 %v825, 4294901760
        %v827 = vsub.f32 %v825, %v826
        %v828 = vand.u32 %v827, 4294901760
        %829 = vmatpush.msra.mxu0 %v828
        %v830 = vand.u32 %v730, 4294901760
        %831 = vmatmul.f32.gmra.mxu0 %v830
        %v832 = vpop.f32.mrf.mxu0
        %v833 = vadd.f32 %v768, %v832
        %v834 = vand.u32 %v733, 4294901760
        %835 = vmatmul.f32.gmra.mxu0 %v834
        %v836 = vpop.f32.mrf.mxu0
        %v837 = vadd.f32 %v776, %v836
        %v838 = vand.u32 %v736, 4294901760
        %839 = vmatmul.f32.gmra.mxu0 %v838
        %v840 = vpop.f32.mrf.mxu0
        %v841 = vadd.f32 %v784, %v840
        %v842 = vand.u32 %v739, 4294901760
        %843 = vmatmul.f32.gmra.mxu0 %v842
        %v844 = vpop.f32.mrf.mxu0
        %v845 = vadd.f32 %v792, %v844
        %846 = vdwg.mxu0
        %847 = vmatpush.msra.mxu0 0.0
        %848 = vmatpush.msra.mxu0 0.0
        %849 = vmatpush.msra.mxu0 0.0
        %850 = vmatpush.msra.mxu0 0.0
        %851 = vmatpush.msra.mxu0 0.0
        %852 = vmatpush.msra.mxu0 0.0
        %853 = vmatpush.msra.mxu0 0.0
        %854 = vmatpush.msra.mxu0 0.0
        %855 = vmatpush.msra.mxu0 0.0
        %856 = vmatpush.msra.mxu0 0.0
        %857 = vmatpush.msra.mxu0 0.0
        %858 = vmatpush.msra.mxu0 0.0
        %v859 = vand.u32 %v699, 4294901760
        %v860 = vsub.f32 %v699, %v859
        %861 = vmatpush.msra.mxu0 %v860
        %v862 = vand.u32 %v698, 4294901760
        %v863 = vsub.f32 %v698, %v862
        %864 = vmatpush.msra.mxu0 %v863
        %v865 = vand.u32 %v697, 4294901760
        %v866 = vsub.f32 %v697, %v865
        %867 = vmatpush.msra.mxu0 %v866
        %v868 = vand.u32 %v696, 4294901760
        %v869 = vsub.f32 %v696, %v868
        %870 = vmatpush.msra.mxu0 %v869
        %v871 = vand.u32 %v730, 4294901760
        %v872 = vsub.f32 %v730, %v871
        %873 = vmatmul.f32.gmra.mxu0 %v872
        %v874 = vpop.f32.mrf.mxu0
        %v875 = vadd.f32 %v833, %v874
        %v876 = vand.u32 %v733, 4294901760
        %v877 = vsub.f32 %v733, %v876
        %878 = vmatmul.f32.gmra.mxu0 %v877
        %v879 = vpop.f32.mrf.mxu0
        %v880 = vadd.f32 %v837, %v879
        %v881 = vand.u32 %v736, 4294901760
        %v882 = vsub.f32 %v736, %v881
        %883 = vmatmul.f32.gmra.mxu0 %v882
        %v884 = vpop.f32.mrf.mxu0
        %v885 = vadd.f32 %v841, %v884
        %v886 = vand.u32 %v739, 4294901760
        %v887 = vsub.f32 %v739, %v886
        %888 = vmatmul.f32.gmra.mxu0 %v887
        %v889 = vpop.f32.mrf.mxu0
        %v890 = vadd.f32 %v845, %v889
        %891 = vdwg.mxu0
        %892 = vmatpush.msra.mxu0 0.0
        %893 = vmatpush.msra.mxu0 0.0
        %894 = vmatpush.msra.mxu0 0.0
        %895 = vmatpush.msra.mxu0 0.0
        %896 = vmatpush.msra.mxu0 0.0
        %897 = vmatpush.msra.mxu0 0.0
        %898 = vmatpush.msra.mxu0 0.0
        %899 = vmatpush.msra.mxu0 0.0
        %900 = vmatpush.msra.mxu0 0.0
        %901 = vmatpush.msra.mxu0 0.0
        %902 = vmatpush.msra.mxu0 0.0
        %903 = vmatpush.msra.mxu0 0.0
        %v904 = vand.u32 %v699, 4294901760
        %905 = vmatpush.msra.mxu0 %v904
        %v906 = vand.u32 %v698, 4294901760
        %907 = vmatpush.msra.mxu0 %v906
        %v908 = vand.u32 %v697, 4294901760
        %909 = vmatpush.msra.mxu0 %v908
        %v910 = vand.u32 %v696, 4294901760
        %911 = vmatpush.msra.mxu0 %v910
        %v912 = vand.u32 %v730, 4294901760
        %v913 = vsub.f32 %v730, %v912
        %v914 = vand.u32 %v913, 4294901760
        %915 = vmatmul.f32.gmra.mxu0 %v914
        %v916 = vpop.f32.mrf.mxu0
        %v917 = vadd.f32 %v875, %v916
        %v918 = vand.u32 %v733, 4294901760
        %v919 = vsub.f32 %v733, %v918
        %v920 = vand.u32 %v919, 4294901760
        %921 = vmatmul.f32.gmra.mxu0 %v920
        %v922 = vpop.f32.mrf.mxu0
        %v923 = vadd.f32 %v880, %v922
        %v924 = vand.u32 %v736, 4294901760
        %v925 = vsub.f32 %v736, %v924
        %v926 = vand.u32 %v925, 4294901760
        %927 = vmatmul.f32.gmra.mxu0 %v926
        %v928 = vpop.f32.mrf.mxu0
        %v929 = vadd.f32 %v885, %v928
        %v930 = vand.u32 %v739, 4294901760
        %v931 = vsub.f32 %v739, %v930
        %v932 = vand.u32 %v931, 4294901760
        %933 = vmatmul.f32.gmra.mxu0 %v932
        %v934 = vpop.f32.mrf.mxu0
        %v935 = vadd.f32 %v890, %v934
        %936 = vdwg.mxu0
        %937 = vmatpush.msra.mxu0 0.0
        %938 = vmatpush.msra.mxu0 0.0
        %939 = vmatpush.msra.mxu0 0.0
        %940 = vmatpush.msra.mxu0 0.0
        %941 = vmatpush.msra.mxu0 0.0
        %942 = vmatpush.msra.mxu0 0.0
        %943 = vmatpush.msra.mxu0 0.0
        %944 = vmatpush.msra.mxu0 0.0
        %945 = vmatpush.msra.mxu0 0.0
        %946 = vmatpush.msra.mxu0 0.0
        %947 = vmatpush.msra.mxu0 0.0
        %948 = vmatpush.msra.mxu0 0.0
        %v949 = vand.u32 %v699, 4294901760
        %v950 = vsub.f32 %v699, %v949
        %v951 = vand.u32 %v950, 4294901760
        %952 = vmatpush.msra.mxu0 %v951
        %v953 = vand.u32 %v698, 4294901760
        %v954 = vsub.f32 %v698, %v953
        %v955 = vand.u32 %v954, 4294901760
        %956 = vmatpush.msra.mxu0 %v955
        %v957 = vand.u32 %v697, 4294901760
        %v958 = vsub.f32 %v697, %v957
        %v959 = vand.u32 %v958, 4294901760
        %960 = vmatpush.msra.mxu0 %v959
        %v961 = vand.u32 %v696, 4294901760
        %v962 = vsub.f32 %v696, %v961
        %v963 = vand.u32 %v962, 4294901760
        %964 = vmatpush.msra.mxu0 %v963
        %v965 = vand.u32 %v730, 4294901760
        %966 = vmatmul.f32.gmra.mxu0 %v965
        %v967 = vpop.f32.mrf.mxu0
        %v968 = vadd.f32 %v917, %v967
        %v969 = vand.u32 %v733, 4294901760
        %970 = vmatmul.f32.gmra.mxu0 %v969
        %v971 = vpop.f32.mrf.mxu0
        %v972 = vadd.f32 %v923, %v971
        %v973 = vand.u32 %v736, 4294901760
        %974 = vmatmul.f32.gmra.mxu0 %v973
        %v975 = vpop.f32.mrf.mxu0
        %v976 = vadd.f32 %v929, %v975
        %v977 = vand.u32 %v739, 4294901760
        %978 = vmatmul.f32.gmra.mxu0 %v977
        %v979 = vpop.f32.mrf.mxu0
        %v980 = vadd.f32 %v935, %v979
        %981 = vdwg.mxu0
        %982 = vmatpush.msra.mxu0 0.0
        %983 = vmatpush.msra.mxu0 0.0
        %984 = vmatpush.msra.mxu0 0.0
        %985 = vmatpush.msra.mxu0 0.0
        %986 = vmatpush.msra.mxu0 0.0
        %987 = vmatpush.msra.mxu0 0.0
        %988 = vmatpush.msra.mxu0 0.0
        %989 = vmatpush.msra.mxu0 0.0
        %990 = vmatpush.msra.mxu0 0.0
        %991 = vmatpush.msra.mxu0 0.0
        %992 = vmatpush.msra.mxu0 0.0
        %993 = vmatpush.msra.mxu0 0.0
        %v994 = vand.u32 %v699, 4294901760
        %995 = vmatpush.msra.mxu0 %v994
        %v996 = vand.u32 %v698, 4294901760
        %997 = vmatpush.msra.mxu0 %v996
        %v998 = vand.u32 %v697, 4294901760
        %999 = vmatpush.msra.mxu0 %v998
        %v1000 = vand.u32 %v696, 4294901760
        %1001 = vmatpush.msra.mxu0 %v1000
        %v1002 = vand.u32 %v730, 4294901760
        %1003 = vmatmul.f32.gmra.mxu0 %v1002
        %v1004 = vpop.f32.mrf.mxu0
        %v1005 = vadd.f32 %v968, %v1004
        %v1006 = vand.u32 %v733, 4294901760
        %1007 = vmatmul.f32.gmra.mxu0 %v1006
        %v1008 = vpop.f32.mrf.mxu0
        %v1009 = vadd.f32 %v972, %v1008
        %v1010 = vand.u32 %v736, 4294901760
        %1011 = vmatmul.f32.gmra.mxu0 %v1010
        %v1012 = vpop.f32.mrf.mxu0
        %v1013 = vadd.f32 %v976, %v1012
        %v1014 = vand.u32 %v739, 4294901760
        %1015 = vmatmul.f32.gmra.mxu0 %v1014
        %v1016 = vpop.f32.mrf.mxu0
        %v1017 = vadd.f32 %v980, %v1016
        %1018 = vdwg.mxu0
        %v1019 = vmax.f32 %v1005, 0.0
        %v1020 = vmax.f32 %v1009, 0.0
        %v1021 = vmax.f32 %v1013, 0.0
        %v1022 = vmax.f32 %v1017, 0.0
        %v1023 = vld [vmem:[%s8] sm:$0xf]
        %v1024 = vld [vmem:[%s9] sm:$0xf]
        %1026 = vset.pattern.permute.xlu0 0
        %1027 = vperm.xlu0 %1026, %v1024
        %v1028 = vpop.permute.xlu0 %1027
        %v1031 = vsel %vm728, %v1023, 0
        %1033 = vmatpush.msra.mxu0 0.0
        %1034 = vmatpush.msra.mxu0 0.0
        %1035 = vmatpush.msra.mxu0 0.0
        %1036 = vmatpush.msra.mxu0 0.0
        %1037 = vmatpush.msra.mxu0 0.0
        %1038 = vmatpush.msra.mxu0 0.0
        %1039 = vmatpush.msra.mxu0 0.0
        %1040 = vmatpush.msra.mxu0 0.0
        %1041 = vmatpush.msra.mxu0 0.0
        %1042 = vmatpush.msra.mxu0 0.0
        %1043 = vmatpush.msra.mxu0 0.0
        %1044 = vmatpush.msra.mxu0 0.0
        %v1045 = vand.u32 %v1022, 4294901760
        %1046 = vmatpush.msra.mxu0 %v1045
        %v1047 = vand.u32 %v1021, 4294901760
        %1048 = vmatpush.msra.mxu0 %v1047
        %v1049 = vand.u32 %v1020, 4294901760
        %1050 = vmatpush.msra.mxu0 %v1049
        %v1051 = vand.u32 %v1019, 4294901760
        %1052 = vmatpush.msra.mxu0 %v1051
        %v1053 = vand.u32 %v1031, 4294901760
        %v1054 = vsub.f32 %v1031, %v1053
        %v1055 = vand.u32 %v1054, 4294901760
        %v1056 = vsub.f32 %v1054, %v1055
        %v1057 = vand.u32 %v1056, 4294901760
        %1058 = vmatmul.f32.gmra.mxu0 %v1057
        %v1059 = vpop.f32.mrf.mxu0
        %v1060 = vadd.f32 %v1028, %v1059
        %1061 = vdwg.mxu0
        %1062 = vmatpush.msra.mxu0 0.0
        %1063 = vmatpush.msra.mxu0 0.0
        %1064 = vmatpush.msra.mxu0 0.0
        %1065 = vmatpush.msra.mxu0 0.0
        %1066 = vmatpush.msra.mxu0 0.0
        %1067 = vmatpush.msra.mxu0 0.0
        %1068 = vmatpush.msra.mxu0 0.0
        %1069 = vmatpush.msra.mxu0 0.0
        %1070 = vmatpush.msra.mxu0 0.0
        %1071 = vmatpush.msra.mxu0 0.0
        %1072 = vmatpush.msra.mxu0 0.0
        %1073 = vmatpush.msra.mxu0 0.0
        %v1074 = vand.u32 %v1022, 4294901760
        %v1075 = vsub.f32 %v1022, %v1074
        %v1076 = vand.u32 %v1075, 4294901760
        %v1077 = vsub.f32 %v1075, %v1076
        %v1078 = vand.u32 %v1077, 4294901760
        %1079 = vmatpush.msra.mxu0 %v1078
        %v1080 = vand.u32 %v1021, 4294901760
        %v1081 = vsub.f32 %v1021, %v1080
        %v1082 = vand.u32 %v1081, 4294901760
        %v1083 = vsub.f32 %v1081, %v1082
        %v1084 = vand.u32 %v1083, 4294901760
        %1085 = vmatpush.msra.mxu0 %v1084
        %v1086 = vand.u32 %v1020, 4294901760
        %v1087 = vsub.f32 %v1020, %v1086
        %v1088 = vand.u32 %v1087, 4294901760
        %v1089 = vsub.f32 %v1087, %v1088
        %v1090 = vand.u32 %v1089, 4294901760
        %1091 = vmatpush.msra.mxu0 %v1090
        %v1092 = vand.u32 %v1019, 4294901760
        %v1093 = vsub.f32 %v1019, %v1092
        %v1094 = vand.u32 %v1093, 4294901760
        %v1095 = vsub.f32 %v1093, %v1094
        %v1096 = vand.u32 %v1095, 4294901760
        %1097 = vmatpush.msra.mxu0 %v1096
        %v1098 = vand.u32 %v1031, 4294901760
        %1099 = vmatmul.f32.gmra.mxu0 %v1098
        %v1100 = vpop.f32.mrf.mxu0
        %v1101 = vadd.f32 %v1060, %v1100
        %1102 = vdwg.mxu0
        %1103 = vmatpush.msra.mxu0 0.0
        %1104 = vmatpush.msra.mxu0 0.0
        %1105 = vmatpush.msra.mxu0 0.0
        %1106 = vmatpush.msra.mxu0 0.0
        %1107 = vmatpush.msra.mxu0 0.0
        %1108 = vmatpush.msra.mxu0 0.0
        %1109 = vmatpush.msra.mxu0 0.0
        %1110 = vmatpush.msra.mxu0 0.0
        %1111 = vmatpush.msra.mxu0 0.0
        %1112 = vmatpush.msra.mxu0 0.0
        %1113 = vmatpush.msra.mxu0 0.0
        %1114 = vmatpush.msra.mxu0 0.0
        %v1115 = vand.u32 %v1022, 4294901760
        %v1116 = vsub.f32 %v1022, %v1115
        %1117 = vmatpush.msra.mxu0 %v1116
        %v1118 = vand.u32 %v1021, 4294901760
        %v1119 = vsub.f32 %v1021, %v1118
        %1120 = vmatpush.msra.mxu0 %v1119
        %v1121 = vand.u32 %v1020, 4294901760
        %v1122 = vsub.f32 %v1020, %v1121
        %1123 = vmatpush.msra.mxu0 %v1122
        %v1124 = vand.u32 %v1019, 4294901760
        %v1125 = vsub.f32 %v1019, %v1124
        %1126 = vmatpush.msra.mxu0 %v1125
        %v1127 = vand.u32 %v1031, 4294901760
        %v1128 = vsub.f32 %v1031, %v1127
        %1129 = vmatmul.f32.gmra.mxu0 %v1128
        %v1130 = vpop.f32.mrf.mxu0
        %v1131 = vadd.f32 %v1101, %v1130
        %1132 = vdwg.mxu0
        %1133 = vmatpush.msra.mxu0 0.0
        %1134 = vmatpush.msra.mxu0 0.0
        %1135 = vmatpush.msra.mxu0 0.0
        %1136 = vmatpush.msra.mxu0 0.0
        %1137 = vmatpush.msra.mxu0 0.0
        %1138 = vmatpush.msra.mxu0 0.0
        %1139 = vmatpush.msra.mxu0 0.0
        %1140 = vmatpush.msra.mxu0 0.0
        %1141 = vmatpush.msra.mxu0 0.0
        %1142 = vmatpush.msra.mxu0 0.0
        %1143 = vmatpush.msra.mxu0 0.0
        %1144 = vmatpush.msra.mxu0 0.0
        %v1145 = vand.u32 %v1022, 4294901760
        %1146 = vmatpush.msra.mxu0 %v1145
        %v1147 = vand.u32 %v1021, 4294901760
        %1148 = vmatpush.msra.mxu0 %v1147
        %v1149 = vand.u32 %v1020, 4294901760
        %1150 = vmatpush.msra.mxu0 %v1149
        %v1151 = vand.u32 %v1019, 4294901760
        %1152 = vmatpush.msra.mxu0 %v1151
        %v1153 = vand.u32 %v1031, 4294901760
        %v1154 = vsub.f32 %v1031, %v1153
        %v1155 = vand.u32 %v1154, 4294901760
        %1156 = vmatmul.f32.gmra.mxu0 %v1155
        %v1157 = vpop.f32.mrf.mxu0
        %v1158 = vadd.f32 %v1131, %v1157
        %1159 = vdwg.mxu0
        %1160 = vmatpush.msra.mxu0 0.0
        %1161 = vmatpush.msra.mxu0 0.0
        %1162 = vmatpush.msra.mxu0 0.0
        %1163 = vmatpush.msra.mxu0 0.0
        %1164 = vmatpush.msra.mxu0 0.0
        %1165 = vmatpush.msra.mxu0 0.0
        %1166 = vmatpush.msra.mxu0 0.0
        %1167 = vmatpush.msra.mxu0 0.0
        %1168 = vmatpush.msra.mxu0 0.0
        %1169 = vmatpush.msra.mxu0 0.0
        %1170 = vmatpush.msra.mxu0 0.0
        %1171 = vmatpush.msra.mxu0 0.0
        %v1172 = vand.u32 %v1022, 4294901760
        %v1173 = vsub.f32 %v1022, %v1172
        %v1174 = vand.u32 %v1173, 4294901760
        %1175 = vmatpush.msra.mxu0 %v1174
        %v1176 = vand.u32 %v1021, 4294901760
        %v1177 = vsub.f32 %v1021, %v1176
        %v1178 = vand.u32 %v1177, 4294901760
        %1179 = vmatpush.msra.mxu0 %v1178
        %v1180 = vand.u32 %v1020, 4294901760
        %v1181 = vsub.f32 %v1020, %v1180
        %v1182 = vand.u32 %v1181, 4294901760
        %1183 = vmatpush.msra.mxu0 %v1182
        %v1184 = vand.u32 %v1019, 4294901760
        %v1185 = vsub.f32 %v1019, %v1184
        %v1186 = vand.u32 %v1185, 4294901760
        %1187 = vmatpush.msra.mxu0 %v1186
        %v1188 = vand.u32 %v1031, 4294901760
        %1189 = vmatmul.f32.gmra.mxu0 %v1188
        %v1190 = vpop.f32.mrf.mxu0
        %v1191 = vadd.f32 %v1158, %v1190
        %1192 = vdwg.mxu0
        %1193 = vmatpush.msra.mxu0 0.0
        %1194 = vmatpush.msra.mxu0 0.0
        %1195 = vmatpush.msra.mxu0 0.0
        %1196 = vmatpush.msra.mxu0 0.0
        %1197 = vmatpush.msra.mxu0 0.0
        %1198 = vmatpush.msra.mxu0 0.0
        %1199 = vmatpush.msra.mxu0 0.0
        %1200 = vmatpush.msra.mxu0 0.0
        %1201 = vmatpush.msra.mxu0 0.0
        %1202 = vmatpush.msra.mxu0 0.0
        %1203 = vmatpush.msra.mxu0 0.0
        %1204 = vmatpush.msra.mxu0 0.0
        %v1205 = vand.u32 %v1022, 4294901760
        %1206 = vmatpush.msra.mxu0 %v1205
        %v1207 = vand.u32 %v1021, 4294901760
        %1208 = vmatpush.msra.mxu0 %v1207
        %v1209 = vand.u32 %v1020, 4294901760
        %1210 = vmatpush.msra.mxu0 %v1209
        %v1211 = vand.u32 %v1019, 4294901760
        %1212 = vmatpush.msra.mxu0 %v1211
        %v1213 = vand.u32 %v1031, 4294901760
        %1214 = vmatmul.f32.gmra.mxu0 %v1213
        %v1215 = vpop.f32.mrf.mxu0
        %v1216 = vadd.f32 %v1191, %v1215
        %1217 = vdwg.mxu0
        %v1218 = vld [vmem:[%s3] sm:$0xff]
        %v1219 = vld [vmem:[%s3 + $0x8] sm:$0xff]
        %vm1220 = vcmask 130048
        %v1222 = vsel %vm1220, %v1216, 0
        %1224 = vmatpush.msra.mxu0 0.0
        %1225 = vmatpush.msra.mxu0 0.0
        %1226 = vmatpush.msra.mxu0 0.0
        %1227 = vmatpush.msra.mxu0 0.0
        %1228 = vmatpush.msra.mxu0 0.0
        %1229 = vmatpush.msra.mxu0 0.0
        %1230 = vmatpush.msra.mxu0 0.0
        %1231 = vmatpush.msra.mxu0 0.0
        %1232 = vmatpush.msra.mxu0 0.0
        %1233 = vmatpush.msra.mxu0 0.0
        %1234 = vmatpush.msra.mxu0 0.0
        %1235 = vmatpush.msra.mxu0 0.0
        %1236 = vmatpush.msra.mxu0 0.0
        %1237 = vmatpush.msra.mxu0 0.0
        %v1238 = vand.u32 %v1219, 4294901760
        %1239 = vmatpush.msra.mxu0 %v1238
        %v1240 = vand.u32 %v1218, 4294901760
        %1241 = vmatpush.msra.mxu0 %v1240
        %v1242 = vand.u32 %v1222, 4294901760
        %v1243 = vsub.f32 %v1222, %v1242
        %v1244 = vand.u32 %v1243, 4294901760
        %v1245 = vsub.f32 %v1243, %v1244
        %v1246 = vand.u32 %v1245, 4294901760
        %1247 = vmatmul.f32.gmra.mxu0 %v1246
        %v1248 = vpop.f32.mrf.mxu0
        %v1249 = vadd.f32 0.0, %v1248
        %1250 = vdwg.mxu0
        %1251 = vmatpush.msra.mxu0 0.0
        %1252 = vmatpush.msra.mxu0 0.0
        %1253 = vmatpush.msra.mxu0 0.0
        %1254 = vmatpush.msra.mxu0 0.0
        %1255 = vmatpush.msra.mxu0 0.0
        %1256 = vmatpush.msra.mxu0 0.0
        %1257 = vmatpush.msra.mxu0 0.0
        %1258 = vmatpush.msra.mxu0 0.0
        %1259 = vmatpush.msra.mxu0 0.0
        %1260 = vmatpush.msra.mxu0 0.0
        %1261 = vmatpush.msra.mxu0 0.0
        %1262 = vmatpush.msra.mxu0 0.0
        %1263 = vmatpush.msra.mxu0 0.0
        %1264 = vmatpush.msra.mxu0 0.0
        %v1265 = vand.u32 %v1219, 4294901760
        %v1266 = vsub.f32 %v1219, %v1265
        %v1267 = vand.u32 %v1266, 4294901760
        %v1268 = vsub.f32 %v1266, %v1267
        %v1269 = vand.u32 %v1268, 4294901760
        %1270 = vmatpush.msra.mxu0 %v1269
        %v1271 = vand.u32 %v1218, 4294901760
        %v1272 = vsub.f32 %v1218, %v1271
        %v1273 = vand.u32 %v1272, 4294901760
        %v1274 = vsub.f32 %v1272, %v1273
        %v1275 = vand.u32 %v1274, 4294901760
        %1276 = vmatpush.msra.mxu0 %v1275
        %v1277 = vand.u32 %v1222, 4294901760
        %1278 = vmatmul.f32.gmra.mxu0 %v1277
        %v1279 = vpop.f32.mrf.mxu0
        %v1280 = vadd.f32 %v1249, %v1279
        %1281 = vdwg.mxu0
        %1282 = vmatpush.msra.mxu0 0.0
        %1283 = vmatpush.msra.mxu0 0.0
        %1284 = vmatpush.msra.mxu0 0.0
        %1285 = vmatpush.msra.mxu0 0.0
        %1286 = vmatpush.msra.mxu0 0.0
        %1287 = vmatpush.msra.mxu0 0.0
        %1288 = vmatpush.msra.mxu0 0.0
        %1289 = vmatpush.msra.mxu0 0.0
        %1290 = vmatpush.msra.mxu0 0.0
        %1291 = vmatpush.msra.mxu0 0.0
        %1292 = vmatpush.msra.mxu0 0.0
        %1293 = vmatpush.msra.mxu0 0.0
        %1294 = vmatpush.msra.mxu0 0.0
        %1295 = vmatpush.msra.mxu0 0.0
        %v1296 = vand.u32 %v1219, 4294901760
        %v1297 = vsub.f32 %v1219, %v1296
        %1298 = vmatpush.msra.mxu0 %v1297
        %v1299 = vand.u32 %v1218, 4294901760
        %v1300 = vsub.f32 %v1218, %v1299
        %1301 = vmatpush.msra.mxu0 %v1300
        %v1302 = vand.u32 %v1222, 4294901760
        %v1303 = vsub.f32 %v1222, %v1302
        %1304 = vmatmul.f32.gmra.mxu0 %v1303
        %v1305 = vpop.f32.mrf.mxu0
        %v1306 = vadd.f32 %v1280, %v1305
        %1307 = vdwg.mxu0
        %1308 = vmatpush.msra.mxu0 0.0
        %1309 = vmatpush.msra.mxu0 0.0
        %1310 = vmatpush.msra.mxu0 0.0
        %1311 = vmatpush.msra.mxu0 0.0
        %1312 = vmatpush.msra.mxu0 0.0
        %1313 = vmatpush.msra.mxu0 0.0
        %1314 = vmatpush.msra.mxu0 0.0
        %1315 = vmatpush.msra.mxu0 0.0
        %1316 = vmatpush.msra.mxu0 0.0
        %1317 = vmatpush.msra.mxu0 0.0
        %1318 = vmatpush.msra.mxu0 0.0
        %1319 = vmatpush.msra.mxu0 0.0
        %1320 = vmatpush.msra.mxu0 0.0
        %1321 = vmatpush.msra.mxu0 0.0
        %v1322 = vand.u32 %v1219, 4294901760
        %1323 = vmatpush.msra.mxu0 %v1322
        %v1324 = vand.u32 %v1218, 4294901760
        %1325 = vmatpush.msra.mxu0 %v1324
        %v1326 = vand.u32 %v1222, 4294901760
        %v1327 = vsub.f32 %v1222, %v1326
        %v1328 = vand.u32 %v1327, 4294901760
        %1329 = vmatmul.f32.gmra.mxu0 %v1328
        %v1330 = vpop.f32.mrf.mxu0
        %v1331 = vadd.f32 %v1306, %v1330
        %1332 = vdwg.mxu0
        %1333 = vmatpush.msra.mxu0 0.0
        %1334 = vmatpush.msra.mxu0 0.0
        %1335 = vmatpush.msra.mxu0 0.0
        %1336 = vmatpush.msra.mxu0 0.0
        %1337 = vmatpush.msra.mxu0 0.0
        %1338 = vmatpush.msra.mxu0 0.0
        %1339 = vmatpush.msra.mxu0 0.0
        %1340 = vmatpush.msra.mxu0 0.0
        %1341 = vmatpush.msra.mxu0 0.0
        %1342 = vmatpush.msra.mxu0 0.0
        %1343 = vmatpush.msra.mxu0 0.0
        %1344 = vmatpush.msra.mxu0 0.0
        %1345 = vmatpush.msra.mxu0 0.0
        %1346 = vmatpush.msra.mxu0 0.0
        %v1347 = vand.u32 %v1219, 4294901760
        %v1348 = vsub.f32 %v1219, %v1347
        %v1349 = vand.u32 %v1348, 4294901760
        %1350 = vmatpush.msra.mxu0 %v1349
        %v1351 = vand.u32 %v1218, 4294901760
        %v1352 = vsub.f32 %v1218, %v1351
        %v1353 = vand.u32 %v1352, 4294901760
        %1354 = vmatpush.msra.mxu0 %v1353
        %v1355 = vand.u32 %v1222, 4294901760
        %1356 = vmatmul.f32.gmra.mxu0 %v1355
        %v1357 = vpop.f32.mrf.mxu0
        %v1358 = vadd.f32 %v1331, %v1357
        %1359 = vdwg.mxu0
        %1360 = vmatpush.msra.mxu0 0.0
        %1361 = vmatpush.msra.mxu0 0.0
        %1362 = vmatpush.msra.mxu0 0.0
        %1363 = vmatpush.msra.mxu0 0.0
        %1364 = vmatpush.msra.mxu0 0.0
        %1365 = vmatpush.msra.mxu0 0.0
        %1366 = vmatpush.msra.mxu0 0.0
        %1367 = vmatpush.msra.mxu0 0.0
        %1368 = vmatpush.msra.mxu0 0.0
        %1369 = vmatpush.msra.mxu0 0.0
        %1370 = vmatpush.msra.mxu0 0.0
        %1371 = vmatpush.msra.mxu0 0.0
        %1372 = vmatpush.msra.mxu0 0.0
        %1373 = vmatpush.msra.mxu0 0.0
        %v1374 = vand.u32 %v1219, 4294901760
        %1375 = vmatpush.msra.mxu0 %v1374
        %v1376 = vand.u32 %v1218, 4294901760
        %1377 = vmatpush.msra.mxu0 %v1376
        %v1378 = vand.u32 %v1222, 4294901760
        %1379 = vmatmul.f32.gmra.mxu0 %v1378
        %v1380 = vpop.f32.mrf.mxu0
        %v1381 = vadd.f32 %v1358, %v1380
        %1382 = vdwg.mxu0
        %v1383 = vmul.f32 %v1381, %v1381
        %v1384 = vsel %vm453, %v1383, 0.0
        %v1385 = vrot.slane %v1384, 4
        %v1386 = vadd.f32 %v1384, %v1385
        %v1387 = vrot.slane %v1386, 2
        %v1388 = vadd.f32 %v1386, %v1387
        %v1389 = vrot.slane %v1388, 1
        %v1390 = vadd.f32 %v1388, %v1389
        %1391 = vst [vmem:[%s398] sm:$0x1] %v1390
        %s1392 = sand.u32 %s258, 1
        %s1393 = scalar_lea.sflag [#allocation4], %s1392
        %s1394 = sand.u32 %s258, 1
        %s1395 = scalar_lea.vmem [#allocation3], %s1394
        %s1396 = sand.u32 %s284, 1
        %s1397 = scalar_lea.sflag [#allocation6], %s1396
        %s1398 = sand.u32 %s284, 1
        %s1399 = scalar_lea.vmem [#allocation5], %s1398
        // Predicated region
        $region61: #{structural_feature_space_forward.1} parent=59 // pred_check
          %p1400 = pneg %p268
        $region62: #{structural_feature_space_forward.1} parent=59 // pred_check_branch
          %1402 = sbr.rel (%p1400) target = $region64
        $region63: #{structural_feature_space_forward.1} parent=59 // pred_region
          %1404 = vsyncadd %s1393, 0
          %s1405 = scalar_lea.hbm %s10, %s30
          %s1407 = sshll.u32 %s1395, 4
          %s1408 = int_to_ptr.vmem [resolvable:$true] %s1407
          %s1409 = sshll.u32 %s1405, 4
          %s1410 = int_to_ptr.hbm [resolvable:$true] %s1409
          %1412 = dma.vmem_to_hbm [thread:$0]  %s1408, 16, %s1410, %s1393
        $region64: #{structural_feature_space_forward.1} parent=59 // pred_fallthru
          _
        // Predicated region
        $region65: #{structural_feature_space_forward.1} parent=59 // pred_check
          %p1413 = pneg %p294
        $region66: #{structural_feature_space_forward.1} parent=59 // pred_check_branch
          %1415 = sbr.rel (%p1413) target = $region68
        $region67: #{structural_feature_space_forward.1} parent=59 // pred_region
          %1417 = vsyncadd %s1397, 0
          %s1418 = scalar_lea.hbm %s11, %s30
          %s1420 = sshll.u32 %s1399, 4
          %s1421 = int_to_ptr.vmem [resolvable:$true] %s1420
          %s1422 = sshll.u32 %s1418, 4
          %s1423 = int_to_ptr.hbm [resolvable:$true] %s1422
          %1425 = dma.vmem_to_hbm [thread:$0]  %s1421, 16, %s1423, %s1397
        $region68: #{structural_feature_space_forward.1} parent=59 // pred_fallthru
          _
      $region60: #{structural_feature_space_forward.1} parent=5 // pred_fallthru
        _
      %p1426 = scmp.le.s32.totalorder 2, %s25
      // Predicated region
      $region69: #{structural_feature_space_forward.1} parent=5 // pred_check
        %p1427 = pneg %p1426
      $region70: #{structural_feature_space_forward.1} parent=5 // pred_check_branch
        %1429 = sbr.rel (%p1427) target = $region72
      $region71: #{structural_feature_space_forward.1} parent=5 // pred_region
        %s1430 = ssub.s32 %s25, 2
        // Predicated region
        $region73: #{structural_feature_space_forward.1} parent=71 // pred_check
          %p1431 = pneg %p274
        $region74: #{structural_feature_space_forward.1} parent=71 // pred_check_branch
          %1433 = sbr.rel (%p1431) target = $region76
        $region75: #{structural_feature_space_forward.1} parent=71 // pred_region
          %s1434 = sand.u32 %s259, 1
          %s1435 = scalar_lea.sflag [#allocation4], %s1434
          %s1436 = sand.u32 %s259, 1
          %s1437 = scalar_lea.vmem [#allocation3], %s1436
          %1439 = dma.done %s1435, 16
        $region76: #{structural_feature_space_forward.1} parent=71 // pred_fallthru
          _
        // Predicated region
        $region77: #{structural_feature_space_forward.1} parent=71 // pred_check
          %p1440 = pneg %p300
        $region78: #{structural_feature_space_forward.1} parent=71 // pred_check_branch
          %1442 = sbr.rel (%p1440) target = $region80
        $region79: #{structural_feature_space_forward.1} parent=71 // pred_region
          %s1443 = sand.u32 %s285, 1
          %s1444 = scalar_lea.sflag [#allocation6], %s1443
          %s1445 = sand.u32 %s285, 1
          %s1446 = scalar_lea.vmem [#allocation5], %s1445
          %1448 = dma.done %s1444, 16
        $region80: #{structural_feature_space_forward.1} parent=71 // pred_fallthru
          _
      $region72: #{structural_feature_space_forward.1} parent=5 // pred_fallthru
        _
    $region6: #{structural_feature_space_forward.1} parent=1 // loop_footer
      %s29 = sadd.s32 1, %s25
    $region7: #{structural_feature_space_forward.1} parent=1 // loop_footer_branch
      %24 = sbr.rel target = $region3
    $region8: #{structural_feature_space_forward.1} parent=1 // loop_exit
      _
    %1449 = vsyncpa [#allocation4], 1
    %s1450 = scalar_lea.sflag [#allocation4], 1
    %1451 = vsyncpa %s1450, 1
    %1452 = vsyncpa [#allocation6], 1
    %s1453 = scalar_lea.sflag [#allocation6], 1
    %1454 = vsyncpa %s1453, 1

</llo_original>
